<compile_context>
chip_gen: v7x
topology: tpu7x:2x2x1
jax: 0.10.0
libtpu: 0.0.40
codegen_flags: <defaults>
</compile_context>

<pallas_src>
import functools

import jax
import jax.numpy as jnp
from jax.experimental import pallas as pl
from jax.experimental.pallas import tpu as pltpu


def _cdiv(a, b):
    return -(-a // b)


def _round_up(a, b):
    return _cdiv(a, b) * b


def _log_sigmoid(x):
    # Numerically stable log(sigmoid(x)) = min(x, 0) - log1p(exp(-|x|)).
    return jnp.minimum(x, 0.0) - jnp.log1p(jnp.exp(-jnp.abs(x)))


def _w2v_kernel(v_ref, u_ref, neg_ref, out_ref, *,
                num_negatives, embed_size, batch_size, block_rows):
    """One batch tile.

    v_ref, u_ref : (TB, E)     center / context embeddings (transport dtype)
    neg_ref      : (TB, K*E)   flattened negative vectors   (transport dtype)
    out_ref      : (1, 1, 128) per-tile partial sum of (pos + neg) log-likelihoods,
                   broadcast across 128 lanes (lane-dense store).
    """
    # Upcast after the DMA: cheap transport dtype over HBM, f32 compute/accumulate
    # (v5e has no bf16 VALU, so the f32 path is the right one on every generation).
    u = u_ref[...].astype(jnp.float32)                       # (TB, E)
    v = v_ref[...].astype(jnp.float32)                       # (TB, E)
    neg = neg_ref[...].astype(jnp.float32)                   # (TB, K*E)

    loss = _log_sigmoid(jnp.sum(v * u, axis=1, keepdims=True))   # (TB, 1)

    # K is a small static int: per-k static lane-slice of the already-loaded 2-D value,
    # multiply + lane-reduce.  Stays in the native (sublane, lane) layout; no (TB,K,E)
    # broadcast of u and no per-k sublane-gather copies.
    for k in range(num_negatives):
        nk = neg[:, k * embed_size:(k + 1) * embed_size]          # (TB, E)
        neg_score = jnp.sum(nk * u, axis=1, keepdims=True)        # (TB, 1)
        loss = loss + _log_sigmoid(-neg_score)

    # Mask rows past the real batch.  Inputs are NOT padded in HBM; the ragged last tile
    # simply reads undefined rows, and jnp.where (a select) discards them safely even if
    # they decode to NaN/Inf.
    row = (pl.program_id(0) * block_rows
           + jax.lax.broadcasted_iota(jnp.int32, (block_rows, 1), 0))
    loss = jnp.where(row < batch_size, loss, 0.0)

    tile_sum = jnp.sum(loss, axis=0, keepdims=True)               # (1, 1)
    out_ref[...] = jnp.broadcast_to(tile_sum.reshape(1, 1, 1), out_ref.shape)


def word2vec_negative_sampling_loss(embed_v, embed_u, center_word, context_word,
                                    negative_samples, *, block_b=2048,
                                    transport_dtype=jnp.bfloat16):
    """-(mean over batch of [log sigmoid(<v,u>) + sum_k log sigmoid(-<neg_k,u>)])."""
    B = int(negative_samples.shape[0])
    K = int(negative_samples.shape[1])
    E = int(negative_samples.shape[2])

    # ---- tile selection --------------------------------------------------------------
    rows = _cdiv(B, 128)                  # number of 128-row groups in the batch
    want = max(1, block_b // 128)
    if rows >= 2:
        # Guarantee >= 2 grid tiles so v7x's two TensorCores both get work.
        want = min(want, _cdiv(rows, 2))
    tb = min(want, rows) * 128
    num_tiles = _cdiv(B, tb)

    # ---- transport-dtype casts (halve bytes of the dominant HBM streams) --------------
    def _to_transport(x):
        if jnp.dtype(x.dtype).itemsize > jnp.dtype(transport_dtype).itemsize:
            return x.astype(transport_dtype)
        return x

    cw = center_word.astype(jnp.int32)
    xw = context_word.astype(jnp.int32)
    # Cast the small (V, E) tables first, then gather: the (B, E) activations are produced
    # directly in the transport dtype with no extra f32 pass over HBM.
    # TODO(synk): when V*E fits VMEM, the gather itself could move in-kernel via scalar prefetch.
    v = _to_transport(embed_v)[cw]                                # (B, E)
    u = _to_transport(embed_u)[xw]                                # (B, E)
    # Free row-major reshape: (B, K, E) -> (B, K*E) gives a contiguous 2-D block and avoids
    # the ~20x (8,128) layout inflation of a tiny (K, E) trailing tile.
    neg = _to_transport(negative_samples).reshape(B, K * E)       # (B, K*E)

    # ---- VMEM budget from (8,128)-padded shapes (double-buffered), capped at 48 MiB ----
    t_isz = jnp.dtype(v.dtype).itemsize
    n_isz = jnp.dtype(neg.dtype).itemsize
    in_bytes = (2 * tb * _round_up(E, 128) * t_isz
                + tb * _round_up(K * E, 128) * n_isz)
    out_bytes = 128 * 4
    vmem_limit = int(min(max(2 * (in_bytes + out_bytes) + (4 << 20), 16 << 20), 48 << 20))

    kernel = functools.partial(_w2v_kernel, num_negatives=K, embed_size=E,
                               batch_size=B, block_rows=tb)
    out = pl.pallas_call(
        kernel,
        out_shape=jax.ShapeDtypeStruct((num_tiles, 1, 128), jnp.float32),
        grid_spec=pltpu.PrefetchScalarGridSpec(
            num_scalar_prefetch=0,
            grid=(num_tiles,),
            in_specs=[
                pl.BlockSpec((tb, E), lambda i: (i, 0)),
                pl.BlockSpec((tb, E), lambda i: (i, 0)),
                pl.BlockSpec((tb, K * E), lambda i: (i, 0)),
            ],
            out_specs=pl.BlockSpec((1, 1, 128), lambda i: (i, 0, 0)),
        ),
        compiler_params=pltpu.CompilerParams(
            # Tiles are independent -> parallel grid axis (v7x megacore splits the batch).
            dimension_semantics=("parallel",),
            vmem_limit_bytes=vmem_limit,
        ),
    )(v, u, neg)

    total = jnp.sum(out[:, 0, 0])        # sum of per-tile partials (padded rows masked)
    return -(total / jnp.float32(B))


def _reference_loss(embed_v, embed_u, center_word, context_word, negative_samples):
    """Pure-JAX reference mirroring the (intended) PyTorch forward."""
    v = embed_v[center_word]
    u = embed_u[context_word]
    pos_score = jnp.sum(v * u, axis=1)
    pos_loss = jax.nn.log_sigmoid(pos_score)
    neg_score = jnp.einsum("bke,be->bk", negative_samples, u)
    neg_loss = jnp.sum(jax.nn.log_sigmoid(-neg_score), axis=1)
    return -jnp.mean(pos_loss + neg_loss)


if __name__ == "__main__":
    # Vocabulary from the module's text (sorted for determinism).
    text = "We are learning natural language processing with neural networks"
    words = text.lower().split()
    vocab = sorted(set(words))
    vocab_size = len(vocab)          # 9
    embed_size = 10
    num_negatives = 5
    batch = 300                      # not a multiple of the tile -> exercises the ragged mask

    key = jax.random.PRNGKey(0)
    k_v, k_u, k_c, k_x, k_n = jax.random.split(key, 5)

    # nn.Embedding default init: N(0, 1)
    embed_v = jax.random.normal(k_v, (vocab_size, embed_size), dtype=jnp.float32)
    embed_u = jax.random.normal(k_u, (vocab_size, embed_size), dtype=jnp.float32)

    center_word = jax.random.randint(k_c, (batch,), 0, vocab_size, dtype=jnp.int32)
    context_word = jax.random.randint(k_x, (batch,), 0, vocab_size, dtype=jnp.int32)
    negative_samples = jax.random.normal(
        k_n, (batch, num_negatives, embed_size), dtype=jnp.float32)

    ref = jax.block_until_ready(_reference_loss(
        embed_v, embed_u, center_word, context_word, negative_samples))

    # Exact-transport path (f32): block_b=128 -> 3 batch tiles, last one ragged & masked.
    loss_f32 = jax.block_until_ready(word2vec_negative_sampling_loss(
        embed_v, embed_u, center_word, context_word, negative_samples,
        block_b=128, transport_dtype=jnp.float32))
    assert jnp.isfinite(loss_f32), loss_f32
    assert jnp.allclose(loss_f32, ref, rtol=1e-5, atol=1e-5), (loss_f32, ref)

    # Default path: bf16 transport over HBM, f32 accumulation in-kernel, 2 parallel tiles.
    loss_bf16 = jax.block_until_ready(word2vec_negative_sampling_loss(
        embed_v, embed_u, center_word, context_word, negative_samples))
    assert jnp.isfinite(loss_bf16), loss_bf16
    assert jnp.allclose(loss_bf16, ref, rtol=5e-2, atol=5e-2), (loss_bf16, ref)

    print("KERNEL_OK")
</pallas_src>

<mosaic_0001>
module attributes {stable_mosaic.version = 11 : i64} {
  func.func @_w2v_kernel(%arg0: i32, %arg1: memref<128x10xf32, #tpu.memory_space<vmem>>, %arg2: memref<128x10xf32, #tpu.memory_space<vmem>>, %arg3: memref<128x50xf32, #tpu.memory_space<vmem>>, %arg4: memref<1x1x128xf32, #tpu.memory_space<vmem>>) attributes {dimension_semantics = [#tpu.dimension_semantics<parallel>], iteration_bounds = array<i64: 3>, scalar_prefetch = 0 : i64, scratch_operands = 0 : i64, tpu.core_type = #tpu.core_type<tc>, window_params = [{transform_indices = @transform_0, window_bounds = array<i64: 128, 10>}, {transform_indices = @transform_1, window_bounds = array<i64: 128, 10>}, {transform_indices = @transform_2, window_bounds = array<i64: 128, 50>}, {transform_indices = @transform_3, window_bounds = array<i64: 1, 1, 128>}]} {
    %c0 = arith.constant 0 : index
    %c0_0 = arith.constant 0 : index
    %0 = vector.load %arg2[%c0, %c0_0] : memref<128x10xf32, #tpu.memory_space<vmem>>, vector<128x10xf32>
    %c0_1 = arith.constant 0 : index
    %c0_2 = arith.constant 0 : index
    %1 = vector.load %arg1[%c0_1, %c0_2] : memref<128x10xf32, #tpu.memory_space<vmem>>, vector<128x10xf32>
    %c0_3 = arith.constant 0 : index
    %c0_4 = arith.constant 0 : index
    %2 = vector.load %arg3[%c0_3, %c0_4] : memref<128x50xf32, #tpu.memory_space<vmem>>, vector<128x50xf32>
    %3 = arith.mulf %1, %0 : vector<128x10xf32>
    %cst = arith.constant dense<0.000000e+00> : vector<128xf32>
    %4 = vector.multi_reduction <add>, %3, %cst [1] : vector<128x10xf32> to vector<128xf32>
    %5 = vector.shape_cast %4 : vector<128xf32> to vector<128x1xf32>
    %cst_5 = arith.constant 0.000000e+00 : f32
    %6 = vector.broadcast %cst_5 : f32 to vector<128x1xf32>
    %7 = arith.minimumf %5, %6 : vector<128x1xf32>
    %8 = math.absf %5 : vector<128x1xf32>
    %cst_6 = arith.constant 0.000000e+00 : f32
    %9 = vector.broadcast %cst_6 : f32 to vector<128x1xf32>
    %10 = arith.subf %9, %8 : vector<128x1xf32>
    %11 = math.exp %10 : vector<128x1xf32>
    %12 = math.log1p %11 : vector<128x1xf32>
    %13 = arith.subf %7, %12 : vector<128x1xf32>
    %14 = vector.extract_strided_slice %2 {offsets = [0, 0], sizes = [128, 10], strides = [1, 1]} : vector<128x50xf32> to vector<128x10xf32>
    %15 = arith.mulf %14, %0 : vector<128x10xf32>
    %cst_7 = arith.constant dense<0.000000e+00> : vector<128xf32>
    %16 = vector.multi_reduction <add>, %15, %cst_7 [1] : vector<128x10xf32> to vector<128xf32>
    %17 = vector.shape_cast %16 : vector<128xf32> to vector<128x1xf32>
    %cst_8 = arith.constant 0.000000e+00 : f32
    %18 = vector.broadcast %cst_8 : f32 to vector<128x1xf32>
    %19 = arith.subf %18, %17 : vector<128x1xf32>
    %cst_9 = arith.constant 0.000000e+00 : f32
    %20 = vector.broadcast %cst_9 : f32 to vector<128x1xf32>
    %21 = arith.minimumf %19, %20 : vector<128x1xf32>
    %22 = math.absf %19 : vector<128x1xf32>
    %cst_10 = arith.constant 0.000000e+00 : f32
    %23 = vector.broadcast %cst_10 : f32 to vector<128x1xf32>
    %24 = arith.subf %23, %22 : vector<128x1xf32>
    %25 = math.exp %24 : vector<128x1xf32>
    %26 = math.log1p %25 : vector<128x1xf32>
    %27 = arith.subf %21, %26 : vector<128x1xf32>
    %28 = arith.addf %13, %27 : vector<128x1xf32>
    %29 = vector.extract_strided_slice %2 {offsets = [0, 10], sizes = [128, 10], strides = [1, 1]} : vector<128x50xf32> to vector<128x10xf32>
    %30 = arith.mulf %29, %0 : vector<128x10xf32>
    %cst_11 = arith.constant dense<0.000000e+00> : vector<128xf32>
    %31 = vector.multi_reduction <add>, %30, %cst_11 [1] : vector<128x10xf32> to vector<128xf32>
    %32 = vector.shape_cast %31 : vector<128xf32> to vector<128x1xf32>
    %cst_12 = arith.constant 0.000000e+00 : f32
    %33 = vector.broadcast %cst_12 : f32 to vector<128x1xf32>
    %34 = arith.subf %33, %32 : vector<128x1xf32>
    %cst_13 = arith.constant 0.000000e+00 : f32
    %35 = vector.broadcast %cst_13 : f32 to vector<128x1xf32>
    %36 = arith.minimumf %34, %35 : vector<128x1xf32>
    %37 = math.absf %34 : vector<128x1xf32>
    %cst_14 = arith.constant 0.000000e+00 : f32
    %38 = vector.broadcast %cst_14 : f32 to vector<128x1xf32>
    %39 = arith.subf %38, %37 : vector<128x1xf32>
    %40 = math.exp %39 : vector<128x1xf32>
    %41 = math.log1p %40 : vector<128x1xf32>
    %42 = arith.subf %36, %41 : vector<128x1xf32>
    %43 = arith.addf %28, %42 : vector<128x1xf32>
    %44 = vector.extract_strided_slice %2 {offsets = [0, 20], sizes = [128, 10], strides = [1, 1]} : vector<128x50xf32> to vector<128x10xf32>
    %45 = arith.mulf %44, %0 : vector<128x10xf32>
    %cst_15 = arith.constant dense<0.000000e+00> : vector<128xf32>
    %46 = vector.multi_reduction <add>, %45, %cst_15 [1] : vector<128x10xf32> to vector<128xf32>
    %47 = vector.shape_cast %46 : vector<128xf32> to vector<128x1xf32>
    %cst_16 = arith.constant 0.000000e+00 : f32
    %48 = vector.broadcast %cst_16 : f32 to vector<128x1xf32>
    %49 = arith.subf %48, %47 : vector<128x1xf32>
    %cst_17 = arith.constant 0.000000e+00 : f32
    %50 = vector.broadcast %cst_17 : f32 to vector<128x1xf32>
    %51 = arith.minimumf %49, %50 : vector<128x1xf32>
    %52 = math.absf %49 : vector<128x1xf32>
    %cst_18 = arith.constant 0.000000e+00 : f32
    %53 = vector.broadcast %cst_18 : f32 to vector<128x1xf32>
    %54 = arith.subf %53, %52 : vector<128x1xf32>
    %55 = math.exp %54 : vector<128x1xf32>
    %56 = math.log1p %55 : vector<128x1xf32>
    %57 = arith.subf %51, %56 : vector<128x1xf32>
    %58 = arith.addf %43, %57 : vector<128x1xf32>
    %59 = vector.extract_strided_slice %2 {offsets = [0, 30], sizes = [128, 10], strides = [1, 1]} : vector<128x50xf32> to vector<128x10xf32>
    %60 = arith.mulf %59, %0 : vector<128x10xf32>
    %cst_19 = arith.constant dense<0.000000e+00> : vector<128xf32>
    %61 = vector.multi_reduction <add>, %60, %cst_19 [1] : vector<128x10xf32> to vector<128xf32>
    %62 = vector.shape_cast %61 : vector<128xf32> to vector<128x1xf32>
    %cst_20 = arith.constant 0.000000e+00 : f32
    %63 = vector.broadcast %cst_20 : f32 to vector<128x1xf32>
    %64 = arith.subf %63, %62 : vector<128x1xf32>
    %cst_21 = arith.constant 0.000000e+00 : f32
    %65 = vector.broadcast %cst_21 : f32 to vector<128x1xf32>
    %66 = arith.minimumf %64, %65 : vector<128x1xf32>
    %67 = math.absf %64 : vector<128x1xf32>
    %cst_22 = arith.constant 0.000000e+00 : f32
    %68 = vector.broadcast %cst_22 : f32 to vector<128x1xf32>
    %69 = arith.subf %68, %67 : vector<128x1xf32>
    %70 = math.exp %69 : vector<128x1xf32>
    %71 = math.log1p %70 : vector<128x1xf32>
    %72 = arith.subf %66, %71 : vector<128x1xf32>
    %73 = arith.addf %58, %72 : vector<128x1xf32>
    %74 = vector.extract_strided_slice %2 {offsets = [0, 40], sizes = [128, 10], strides = [1, 1]} : vector<128x50xf32> to vector<128x10xf32>
    %75 = arith.mulf %74, %0 : vector<128x10xf32>
    %cst_23 = arith.constant dense<0.000000e+00> : vector<128xf32>
    %76 = vector.multi_reduction <add>, %75, %cst_23 [1] : vector<128x10xf32> to vector<128xf32>
    %77 = vector.shape_cast %76 : vector<128xf32> to vector<128x1xf32>
    %cst_24 = arith.constant 0.000000e+00 : f32
    %78 = vector.broadcast %cst_24 : f32 to vector<128x1xf32>
    %79 = arith.subf %78, %77 : vector<128x1xf32>
    %cst_25 = arith.constant 0.000000e+00 : f32
    %80 = vector.broadcast %cst_25 : f32 to vector<128x1xf32>
    %81 = arith.minimumf %79, %80 : vector<128x1xf32>
    %82 = math.absf %79 : vector<128x1xf32>
    %cst_26 = arith.constant 0.000000e+00 : f32
    %83 = vector.broadcast %cst_26 : f32 to vector<128x1xf32>
    %84 = arith.subf %83, %82 : vector<128x1xf32>
    %85 = math.exp %84 : vector<128x1xf32>
    %86 = math.log1p %85 : vector<128x1xf32>
    %87 = arith.subf %81, %86 : vector<128x1xf32>
    %88 = arith.addf %73, %87 : vector<128x1xf32>
    %c128_i32 = arith.constant 128 : i32
    %89 = arith.muli %arg0, %c128_i32 : i32
    %90 = tpu.iota {dimensions = array<i32: 0>} : vector<128x1xi32>
    %91 = vector.broadcast %89 : i32 to vector<128x1xi32>
    %92 = arith.addi %91, %90 : vector<128x1xi32>
    %c300_i32 = arith.constant 300 : i32
    %93 = vector.broadcast %c300_i32 : i32 to vector<128x1xi32>
    %94 = arith.cmpi slt, %92, %93 : vector<128x1xi32>
    %cst_27 = arith.constant 0.000000e+00 : f32
    %95 = vector.broadcast %cst_27 : f32 to vector<128x1xf32>
    %96 = arith.select %94, %88, %95 : vector<128x1xi1>, vector<128x1xf32>
    %cst_28 = arith.constant dense<0.000000e+00> : vector<1xf32>
    %97 = vector.multi_reduction <add>, %96, %cst_28 [0] : vector<128x1xf32> to vector<1xf32>
    %98 = vector.shape_cast %97 : vector<1xf32> to vector<1x1xf32>
    %99 = vector.shape_cast %98 : vector<1x1xf32> to vector<1x1x1xf32>
    %100 = vector.shape_cast %99 : vector<1x1x1xf32> to vector<1x1x1xf32>
    %101 = vector.broadcast %100 : vector<1x1x1xf32> to vector<1x1x128xf32>
    %c0_29 = arith.constant 0 : index
    %c0_30 = arith.constant 0 : index
    %c0_31 = arith.constant 0 : index
    %102 = vector.load %arg4[%c0_29, %c0_30, %c0_31] : memref<1x1x128xf32, #tpu.memory_space<vmem>>, vector<1x1x128xf32>
    tpu.vector_store %arg4[%c0_29, %c0_30, %c0_31], %101 {strides = array<i32>} : memref<1x1x128xf32, #tpu.memory_space<vmem>>, vector<1x1x128xf32>,
    return
  }
  func.func @transform_0(%arg0: i32) -> (i32, i32) {
    %c0_i32 = arith.constant 0 : i32
    %c0_i32_0 = arith.constant 0 : i32
    return %arg0, %c0_i32 : i32, i32
  }
  func.func @transform_1(%arg0: i32) -> (i32, i32) {
    %c0_i32 = arith.constant 0 : i32
    %c0_i32_0 = arith.constant 0 : i32
    return %arg0, %c0_i32 : i32, i32
  }
  func.func @transform_2(%arg0: i32) -> (i32, i32) {
    %c0_i32 = arith.constant 0 : i32
    %c0_i32_0 = arith.constant 0 : i32
    return %arg0, %c0_i32 : i32, i32
  }
  func.func @transform_3(%arg0: i32) -> (i32, i32, i32) {
    %c0_i32 = arith.constant 0 : i32
    %c0_i32_0 = arith.constant 0 : i32
    %c0_i32_1 = arith.constant 0 : i32
    return %arg0, %c0_i32, %c0_i32_0 : i32, i32, i32
  }
}

</mosaic_0001>

<llo_original>
// kernel: tpu_custom_call.1
$region0: #{tpu_custom_call.1}
  #allocation0 [shape = 'u32[]', space=smem, size = 0x4, offset = 0x4, fixed_abs, tag = 'smem constant byte address 0x4 - core index']
  #allocation1 [shape = 'u32[144,128]{1,0:T(1,128)}', space=vmem, size = 0x12000, scoped, tag = 'internal scratch']
  %s0 = inlined_call_operand.vmem [shape: f32[300,10], index: 0, kind: input, shape index: {}]
  %s1 = inlined_call_operand.vmem [shape: f32[300,10], index: 1, kind: input, shape index: {}]
  %s2 = inlined_call_operand.vmem [shape: f32[300,50], index: 2, kind: input, shape index: {}]
  %s3 = inlined_call_operand.hbm [shape: f32[3,1,128], index: 3, kind: output, shape index: {}]
  %s4 = sld [smem:[#allocation0]]
  $region45: #{tpu_custom_call.1} parent=0
    _
  %s6 = ssub.s32 1, %s4
  %s7 = scalar_select 0, %s6, %s4
  $region1: #{tpu_custom_call.1} parent=0
    #allocation2 [shape = 'u8[1024]{0}', space=vmem, size = 0x400, scoped, tag = 'output window, operand 0']
    #allocation3 [shape = 's32[2]{0}', space=sflag, size = 0x8, scoped, tag = 'scoped memory for tpu_custom_call.1']
    %8 = vsyncpa [#allocation3], 0
    %s9 = scalar_lea.sflag [#allocation3], 1
    %10 = vsyncpa %s9, 0
    loop: start=0, step=1, limit=5
    $region2: #{tpu_custom_call.1} parent=1 // loop_pre_header
      _
    $region3: #{tpu_custom_call.1} parent=1 // loop_header
      %s12 = sphi 0, %s16
      %p13 = scmp.ge.s32.totalorder %s12, 5
      %s22 = sphi 0, %s24
      %s25 = sphi 0, %s22
      %s26 = sphi 0, %s25
      %s42 = sphi 0, %s26
      %s48 = sphi 0, %s50
      %s51 = sphi 0, %s48
      %s52 = sphi 0, %s51
      %s68 = sphi 0, %s52
      %s74 = sphi 0, %s76
      %s77 = sphi 0, %s74
      %s78 = sphi 0, %s77
      %s94 = sphi 0, %s78
      %s100 = sphi 0, %s102
      %s103 = sphi 0, %s100
      %s104 = sphi 0, %s103
      %s120 = sphi 0, %s104
    $region4: #{tpu_custom_call.1} parent=1 // loop_header_branch
      %15 = sbr.rel (%p13) target = $region8
    $region5: #{tpu_custom_call.1} parent=1 // loop_body
      %s17 = ssub.s32 %s12, 1
      %s18 = ssub.s32 %s12, 2
      %s19 = sadd.s32 %s12, 1
      %s20 = ssub.s32 %s12, %s19
      %p21 = scmp.eq.s32.totalorder %s20, 0
      %s23 = sadd.s32 %s22, 1
      %s24 = scalar_select %p21, %s22, %s23
      %p27 = pneg %p21
      %p28 = scmp.eq.s32.totalorder %s12, 2
      %p29 = por %p27, %p28
      %p30 = scmp.ne.s32.totalorder %s22, %s25
      %p31 = scmp.eq.s32.totalorder %s12, 0
      %p32 = por %p30, %p31
      %p33 = scmp.ne.s32.totalorder %s22, %s25
      %p34 = scmp.eq.s32.totalorder %s17, 2
      %p35 = por %p33, %p34
      %p36 = scmp.ne.s32.totalorder %s25, %s26
      %p37 = scmp.eq.s32.totalorder %s17, 0
      %p38 = por %p36, %p37
      %p39 = scmp.ne.s32.totalorder %s25, %s26
      %p40 = scmp.eq.s32.totalorder %s18, 2
      %p41 = por %p39, %p40
      %p43 = scmp.ne.s32.totalorder %s26, %s42
      %p44 = scmp.eq.s32.totalorder %s18, 0
      %p45 = por %p43, %p44
      %s46 = ssub.s32 %s12, %s19
      %p47 = scmp.eq.s32.totalorder %s46, 0
      %s49 = sadd.s32 %s48, 1
      %s50 = scalar_select %p47, %s48, %s49
      %p53 = pneg %p47
      %p54 = scmp.eq.s32.totalorder %s12, 2
      %p55 = por %p53, %p54
      %p56 = scmp.ne.s32.totalorder %s48, %s51
      %p57 = scmp.eq.s32.totalorder %s12, 0
      %p58 = por %p56, %p57
      %p59 = scmp.ne.s32.totalorder %s48, %s51
      %p60 = scmp.eq.s32.totalorder %s17, 2
      %p61 = por %p59, %p60
      %p62 = scmp.ne.s32.totalorder %s51, %s52
      %p63 = scmp.eq.s32.totalorder %s17, 0
      %p64 = por %p62, %p63
      %p65 = scmp.ne.s32.totalorder %s51, %s52
      %p66 = scmp.eq.s32.totalorder %s18, 2
      %p67 = por %p65, %p66
      %p69 = scmp.ne.s32.totalorder %s52, %s68
      %p70 = scmp.eq.s32.totalorder %s18, 0
      %p71 = por %p69, %p70
      %s72 = ssub.s32 %s12, %s19
      %p73 = scmp.eq.s32.totalorder %s72, 0
      %s75 = sadd.s32 %s74, 1
      %s76 = scalar_select %p73, %s74, %s75
      %p79 = pneg %p73
      %p80 = scmp.eq.s32.totalorder %s12, 2
      %p81 = por %p79, %p80
      %p82 = scmp.ne.s32.totalorder %s74, %s77
      %p83 = scmp.eq.s32.totalorder %s12, 0
      %p84 = por %p82, %p83
      %p85 = scmp.ne.s32.totalorder %s74, %s77
      %p86 = scmp.eq.s32.totalorder %s17, 2
      %p87 = por %p85, %p86
      %p88 = scmp.ne.s32.totalorder %s77, %s78
      %p89 = scmp.eq.s32.totalorder %s17, 0
      %p90 = por %p88, %p89
      %p91 = scmp.ne.s32.totalorder %s77, %s78
      %p92 = scmp.eq.s32.totalorder %s18, 2
      %p93 = por %p91, %p92
      %p95 = scmp.ne.s32.totalorder %s78, %s94
      %p96 = scmp.eq.s32.totalorder %s18, 0
      %p97 = por %p95, %p96
      %s98 = ssub.s32 %s12, %s19
      %p99 = scmp.eq.s32.totalorder %s98, 0
      %s101 = sadd.s32 %s100, 1
      %s102 = scalar_select %p99, %s100, %s101
      %p105 = pneg %p99
      %p106 = scmp.eq.s32.totalorder %s12, 2
      %p107 = por %p105, %p106
      %p108 = scmp.ne.s32.totalorder %s100, %s103
      %p109 = scmp.eq.s32.totalorder %s12, 0
      %p110 = por %p108, %p109
      %p111 = scmp.ne.s32.totalorder %s100, %s103
      %p112 = scmp.eq.s32.totalorder %s17, 2
      %p113 = por %p111, %p112
      %p114 = scmp.ne.s32.totalorder %s103, %s104
      %p115 = scmp.eq.s32.totalorder %s17, 0
      %p116 = por %p114, %p115
      %p117 = scmp.ne.s32.totalorder %s103, %s104
      %p118 = scmp.eq.s32.totalorder %s18, 2
      %p119 = por %p117, %p118
      %p121 = scmp.ne.s32.totalorder %s104, %s120
      %p122 = scmp.eq.s32.totalorder %s18, 0
      %p123 = por %p121, %p122
      %p124 = scmp.le.s32.totalorder 1, %s12
      %p125 = scmp.lt.s32.totalorder %s12, 4
      %p126 = pnand %p124, %p125
      %p127 = pneg %p126
      // Predicated region
      $region9: #{tpu_custom_call.1} parent=5 // pred_check
        _
      $region10: #{tpu_custom_call.1} parent=5 // pred_check_branch
        %129 = sbr.rel (%p126) target = $region12
      $region11: #{tpu_custom_call.1} parent=5 // pred_region
        %s130 = ssub.s32 %s12, 1
      $region12: #{tpu_custom_call.1} parent=5 // pred_fallthru
        _
      %p131 = scmp.lt.s32.totalorder %s12, 3
      // Predicated region
      $region13: #{tpu_custom_call.1} parent=5 // pred_check
        %p132 = pneg %p131
      $region14: #{tpu_custom_call.1} parent=5 // pred_check_branch
        %134 = sbr.rel (%p132) target = $region16
      $region15: #{tpu_custom_call.1} parent=5 // pred_region
        // Predicated region
        $region17: #{tpu_custom_call.1} parent=15 // pred_check
          %p135 = pneg %p32
        $region18: #{tpu_custom_call.1} parent=15 // pred_check_branch
          %137 = sbr.rel (%p135) target = $region20
        $region19: #{tpu_custom_call.1} parent=15 // pred_region
          %s138 = smul.u32 16, %s12
          %s139 = ssub.s32 38, %s138
          %p140 = scmp.lt.s32.totalorder %s139, 16
          %s141 = scalar_select %p140, %s139, 16
          %s142 = smul.u32 128, %s141
          %p143 = scmp.lt.s32.totalorder %s138, 37
          %s144 = scalar_select %p143, %s138, 37
          %s145 = smul.addr %s144, 8
          %s146 = scalar_lea.vmem %s0, %s145
          %s147 = smul.u32 16, %s12
          %s148 = ssub.s32 38, %s147
          %p149 = scmp.lt.s32.totalorder %s148, 16
          %s150 = scalar_select %p149, %s148, 16
          %s151 = smul.u32 128, %s150
        $region20: #{tpu_custom_call.1} parent=15 // pred_fallthru
          _
        // Predicated region
        $region21: #{tpu_custom_call.1} parent=15 // pred_check
          %p152 = pneg %p58
        $region22: #{tpu_custom_call.1} parent=15 // pred_check_branch
          %154 = sbr.rel (%p152) target = $region24
        $region23: #{tpu_custom_call.1} parent=15 // pred_region
          %s155 = smul.u32 16, %s12
          %s156 = ssub.s32 38, %s155
          %p157 = scmp.lt.s32.totalorder %s156, 16
          %s158 = scalar_select %p157, %s156, 16
          %s159 = smul.u32 128, %s158
          %p160 = scmp.lt.s32.totalorder %s155, 37
          %s161 = scalar_select %p160, %s155, 37
          %s162 = smul.addr %s161, 8
          %s163 = scalar_lea.vmem %s1, %s162
          %s164 = smul.u32 16, %s12
          %s165 = ssub.s32 38, %s164
          %p166 = scmp.lt.s32.totalorder %s165, 16
          %s167 = scalar_select %p166, %s165, 16
          %s168 = smul.u32 128, %s167
        $region24: #{tpu_custom_call.1} parent=15 // pred_fallthru
          _
        // Predicated region
        $region25: #{tpu_custom_call.1} parent=15 // pred_check
          %p169 = pneg %p84
        $region26: #{tpu_custom_call.1} parent=15 // pred_check_branch
          %171 = sbr.rel (%p169) target = $region28
        $region27: #{tpu_custom_call.1} parent=15 // pred_region
          %s172 = smul.u32 16, %s12
          %s173 = ssub.s32 38, %s172
          %p174 = scmp.lt.s32.totalorder %s173, 16
          %s175 = scalar_select %p174, %s173, 16
          %s176 = smul.u32 128, %s175
          %p177 = scmp.lt.s32.totalorder %s172, 37
          %s178 = scalar_select %p177, %s172, 37
          %s179 = smul.addr %s178, 8
          %s180 = scalar_lea.vmem %s2, %s179
          %s181 = smul.u32 16, %s12
          %s182 = ssub.s32 38, %s181
          %p183 = scmp.lt.s32.totalorder %s182, 16
          %s184 = scalar_select %p183, %s182, 16
          %s185 = smul.u32 128, %s184
        $region28: #{tpu_custom_call.1} parent=15 // pred_fallthru
          _
      $region16: #{tpu_custom_call.1} parent=5 // pred_fallthru
        _
      %p186 = scmp.le.s32.totalorder 1, %s12
      %p187 = scmp.lt.s32.totalorder %s12, 4
      %p188 = pnand %p186, %p187
      %p189 = pneg %p188
      // Predicated region
      $region29: #{tpu_custom_call.1} parent=5 // pred_check
        _
      $region30: #{tpu_custom_call.1} parent=5 // pred_check_branch
        %191 = sbr.rel (%p188) target = $region32
      $region31: #{tpu_custom_call.1} parent=5 // pred_region
        %s192 = ssub.s32 %s12, 1
        %s193 = smul.u32 16, %s17
        %s194 = ssub.s32 38, %s193
        %p195 = scmp.lt.s32.totalorder %s194, 16
        %s196 = scalar_select %p195, %s194, 16
        %s197 = smul.u32 128, %s196
        %p198 = scmp.lt.s32.totalorder %s193, 37
        %s199 = scalar_select %p198, %s193, 37
        %s200 = smul.addr %s199, 8
        %s201 = scalar_lea.vmem %s0, %s200
        %p202 = pneg %p38
        %p203 = pneg %p35
        %s204 = smul.u32 16, %s17
        %s205 = ssub.s32 38, %s204
        %p206 = scmp.lt.s32.totalorder %s205, 16
        %s207 = scalar_select %p206, %s205, 16
        %s208 = smul.u32 128, %s207
        %p209 = scmp.lt.s32.totalorder %s204, 37
        %s210 = scalar_select %p209, %s204, 37
        %s211 = smul.addr %s210, 8
        %s212 = scalar_lea.vmem %s1, %s211
        %p213 = pneg %p64
        %p214 = pneg %p61
        %s215 = smul.u32 16, %s17
        %s216 = ssub.s32 38, %s215
        %p217 = scmp.lt.s32.totalorder %s216, 16
        %s218 = scalar_select %p217, %s216, 16
        %s219 = smul.u32 128, %s218
        %p220 = scmp.lt.s32.totalorder %s215, 37
        %s221 = scalar_select %p220, %s215, 37
        %s222 = smul.addr %s221, 8
        %s223 = scalar_lea.vmem %s2, %s222
        %p224 = pneg %p90
        %p225 = pneg %p87
        %p226 = pneg %p116
        %p227 = pneg %p113
        %s228 = sand.u32 %s103, 1
        %s229 = scalar_lea.sflag [#allocation3], %s228
        %s230 = sand.u32 %s103, 1
        %s231 = scalar_lea.vmem [#allocation2], %s230
        %s232 = smul.u32 16, %s17
        %s233 = ssub.s32 38, %s232
        %p234 = scmp.lt.s32.totalorder %s233, 16
        %s235 = scalar_select %p234, %s233, 16
        %s236 = smul.u32 128, %s235
        %p237 = scmp.lt.s32.totalorder %s232, 37
        %s238 = scalar_select %p237, %s232, 37
        %s239 = smul.addr %s238, 8
        %s240 = scalar_lea.vmem %s0, %s239
        %s241 = smul.u32 16, %s17
        %s242 = ssub.s32 38, %s241
        %p243 = scmp.lt.s32.totalorder %s242, 16
        %s244 = scalar_select %p243, %s242, 16
        %s245 = smul.u32 128, %s244
        %s246 = smul.u32 16, %s17
        %s247 = ssub.s32 38, %s246
        %p248 = scmp.lt.s32.totalorder %s247, 16
        %s249 = scalar_select %p248, %s247, 16
        %s250 = smul.u32 128, %s249
        %p251 = scmp.lt.s32.totalorder %s246, 37
        %s252 = scalar_select %p251, %s246, 37
        %s253 = smul.addr %s252, 8
        %s254 = scalar_lea.vmem %s1, %s253
        %s255 = smul.u32 16, %s17
        %s256 = ssub.s32 38, %s255
        %p257 = scmp.lt.s32.totalorder %s256, 16
        %s258 = scalar_select %p257, %s256, 16
        %s259 = smul.u32 128, %s258
        %s260 = smul.u32 16, %s17
        %s261 = ssub.s32 38, %s260
        %p262 = scmp.lt.s32.totalorder %s261, 16
        %s263 = scalar_select %p262, %s261, 16
        %s264 = smul.u32 128, %s263
        %p265 = scmp.lt.s32.totalorder %s260, 37
        %s266 = scalar_select %p265, %s260, 37
        %s267 = smul.addr %s266, 8
        %s268 = scalar_lea.vmem %s2, %s267
        %s269 = smul.u32 16, %s17
        %s270 = ssub.s32 38, %s269
        %p271 = scmp.lt.s32.totalorder %s270, 16
        %s272 = scalar_select %p271, %s270, 16
        %s273 = smul.u32 128, %s272
        %v274 = vld [vmem:[%s254] sm:$0xff]
        %v275 = vld [vmem:[%s254 + $0x8] sm:$0xff]
        %v276 = vld [vmem:[%s254 + $0x10] sm:$0xff]
        %v277 = vld [vmem:[%s254 + $0x18] sm:$0xff]
        %v278 = vld [vmem:[%s254 + $0x20] sm:$0xff]
        %v279 = vld [vmem:[%s254 + $0x28] sm:$0xff]
        %v280 = vld [vmem:[%s254 + $0x30] sm:$0xff]
        %v281 = vld [vmem:[%s254 + $0x38] sm:$0xff]
        %v282 = vld [vmem:[%s254 + $0x40] sm:$0xff]
        %v283 = vld [vmem:[%s254 + $0x48] sm:$0xff]
        %v284 = vld [vmem:[%s254 + $0x50] sm:$0xff]
        %v285 = vld [vmem:[%s254 + $0x58] sm:$0xff]
        %v286 = vld [vmem:[%s254 + $0x60] sm:$0xff]
        %v287 = vld [vmem:[%s254 + $0x68] sm:$0xff]
        %v288 = vld [vmem:[%s254 + $0x70] sm:$0xff]
        %v289 = vld [vmem:[%s254 + $0x78] sm:$0xff]
        %v290 = vld [vmem:[%s240] sm:$0xff]
        %v291 = vld [vmem:[%s240 + $0x8] sm:$0xff]
        %v292 = vld [vmem:[%s240 + $0x10] sm:$0xff]
        %v293 = vld [vmem:[%s240 + $0x18] sm:$0xff]
        %v294 = vld [vmem:[%s240 + $0x20] sm:$0xff]
        %v295 = vld [vmem:[%s240 + $0x28] sm:$0xff]
        %v296 = vld [vmem:[%s240 + $0x30] sm:$0xff]
        %v297 = vld [vmem:[%s240 + $0x38] sm:$0xff]
        %v298 = vld [vmem:[%s240 + $0x40] sm:$0xff]
        %v299 = vld [vmem:[%s240 + $0x48] sm:$0xff]
        %v300 = vld [vmem:[%s240 + $0x50] sm:$0xff]
        %v301 = vld [vmem:[%s240 + $0x58] sm:$0xff]
        %v302 = vld [vmem:[%s240 + $0x60] sm:$0xff]
        %v303 = vld [vmem:[%s240 + $0x68] sm:$0xff]
        %v304 = vld [vmem:[%s240 + $0x70] sm:$0xff]
        %v305 = vld [vmem:[%s240 + $0x78] sm:$0xff]
        %v306 = vld [vmem:[%s268] sm:$0xff]
        %v307 = vld [vmem:[%s268 + $0x8] sm:$0xff]
        %v308 = vld [vmem:[%s268 + $0x10] sm:$0xff]
        %v309 = vld [vmem:[%s268 + $0x18] sm:$0xff]
        %v310 = vld [vmem:[%s268 + $0x20] sm:$0xff]
        %v311 = vld [vmem:[%s268 + $0x28] sm:$0xff]
        %v312 = vld [vmem:[%s268 + $0x30] sm:$0xff]
        %v313 = vld [vmem:[%s268 + $0x38] sm:$0xff]
        %v314 = vld [vmem:[%s268 + $0x40] sm:$0xff]
        %v315 = vld [vmem:[%s268 + $0x48] sm:$0xff]
        %v316 = vld [vmem:[%s268 + $0x50] sm:$0xff]
        %v317 = vld [vmem:[%s268 + $0x58] sm:$0xff]
        %v318 = vld [vmem:[%s268 + $0x60] sm:$0xff]
        %v319 = vld [vmem:[%s268 + $0x68] sm:$0xff]
        %v320 = vld [vmem:[%s268 + $0x70] sm:$0xff]
        %v321 = vld [vmem:[%s268 + $0x78] sm:$0xff]
        %v322 = vmul.f32 %v290, %v274
        %v323 = vmul.f32 %v291, %v275
        %v324 = vmul.f32 %v292, %v276
        %v325 = vmul.f32 %v293, %v277
        %v326 = vmul.f32 %v294, %v278
        %v327 = vmul.f32 %v295, %v279
        %v328 = vmul.f32 %v296, %v280
        %v329 = vmul.f32 %v297, %v281
        %v330 = vmul.f32 %v298, %v282
        %v331 = vmul.f32 %v299, %v283
        %v332 = vmul.f32 %v300, %v284
        %v333 = vmul.f32 %v301, %v285
        %v334 = vmul.f32 %v302, %v286
        %v335 = vmul.f32 %v303, %v287
        %v336 = vmul.f32 %v304, %v288
        %v337 = vmul.f32 %v305, %v289
        %vm338 = vcmask 80896
        %v339 = vsel %vm338, %v322, 0.0
        %340 = vadd.xlane.f32.xlu0 %v339
        %v341 = vpop.xlane.xlu0 %340
        %v342 = vsel %vm338, %v323, 0.0
        %343 = vadd.xlane.f32.xlu0 %v342
        %v344 = vpop.xlane.xlu0 %343
        %v345 = vsel %vm338, %v324, 0.0
        %346 = vadd.xlane.f32.xlu0 %v345
        %v347 = vpop.xlane.xlu0 %346
        %v348 = vsel %vm338, %v325, 0.0
        %349 = vadd.xlane.f32.xlu0 %v348
        %v350 = vpop.xlane.xlu0 %349
        %v351 = vsel %vm338, %v326, 0.0
        %352 = vadd.xlane.f32.xlu0 %v351
        %v353 = vpop.xlane.xlu0 %352
        %v354 = vsel %vm338, %v327, 0.0
        %355 = vadd.xlane.f32.xlu0 %v354
        %v356 = vpop.xlane.xlu0 %355
        %v357 = vsel %vm338, %v328, 0.0
        %358 = vadd.xlane.f32.xlu0 %v357
        %v359 = vpop.xlane.xlu0 %358
        %v360 = vsel %vm338, %v329, 0.0
        %361 = vadd.xlane.f32.xlu0 %v360
        %v362 = vpop.xlane.xlu0 %361
        %v363 = vsel %vm338, %v330, 0.0
        %364 = vadd.xlane.f32.xlu0 %v363
        %v365 = vpop.xlane.xlu0 %364
        %v366 = vsel %vm338, %v331, 0.0
        %367 = vadd.xlane.f32.xlu0 %v366
        %v368 = vpop.xlane.xlu0 %367
        %v369 = vsel %vm338, %v332, 0.0
        %370 = vadd.xlane.f32.xlu0 %v369
        %v371 = vpop.xlane.xlu0 %370
        %v372 = vsel %vm338, %v333, 0.0
        %373 = vadd.xlane.f32.xlu0 %v372
        %v374 = vpop.xlane.xlu0 %373
        %v375 = vsel %vm338, %v334, 0.0
        %376 = vadd.xlane.f32.xlu0 %v375
        %v377 = vpop.xlane.xlu0 %376
        %v378 = vsel %vm338, %v335, 0.0
        %379 = vadd.xlane.f32.xlu0 %v378
        %v380 = vpop.xlane.xlu0 %379
        %v381 = vsel %vm338, %v336, 0.0
        %382 = vadd.xlane.f32.xlu0 %v381
        %v383 = vpop.xlane.xlu0 %382
        %v384 = vsel %vm338, %v337, 0.0
        %385 = vadd.xlane.f32.xlu0 %v384
        %v386 = vpop.xlane.xlu0 %385
        %v387 = vmin.f32 %v341, 0.0
        %v388 = vmin.f32 %v344, 0.0
        %v389 = vmin.f32 %v347, 0.0
        %v390 = vmin.f32 %v350, 0.0
        %v391 = vmin.f32 %v353, 0.0
        %v392 = vmin.f32 %v356, 0.0
        %v393 = vmin.f32 %v359, 0.0
        %v394 = vmin.f32 %v362, 0.0
        %v395 = vmin.f32 %v365, 0.0
        %v396 = vmin.f32 %v368, 0.0
        %v397 = vmin.f32 %v371, 0.0
        %v398 = vmin.f32 %v374, 0.0
        %v399 = vmin.f32 %v377, 0.0
        %v400 = vmin.f32 %v380, 0.0
        %v401 = vmin.f32 %v383, 0.0
        %v402 = vmin.f32 %v386, 0.0
        %v403 = vand.u32 2147483647, %v341
        %v404 = vand.u32 2147483647, %v344
        %v405 = vand.u32 2147483647, %v347
        %v406 = vand.u32 2147483647, %v350
        %v407 = vand.u32 2147483647, %v353
        %v408 = vand.u32 2147483647, %v356
        %v409 = vand.u32 2147483647, %v359
        %v410 = vand.u32 2147483647, %v362
        %v411 = vand.u32 2147483647, %v365
        %v412 = vand.u32 2147483647, %v368
        %v413 = vand.u32 2147483647, %v371
        %v414 = vand.u32 2147483647, %v374
        %v415 = vand.u32 2147483647, %v377
        %v416 = vand.u32 2147483647, %v380
        %v417 = vand.u32 2147483647, %v383
        %v418 = vand.u32 2147483647, %v386
        %v419 = vsub.f32 0.0, %v403
        %v420 = vsub.f32 0.0, %v404
        %v421 = vsub.f32 0.0, %v405
        %v422 = vsub.f32 0.0, %v406
        %v423 = vsub.f32 0.0, %v407
        %v424 = vsub.f32 0.0, %v408
        %v425 = vsub.f32 0.0, %v409
        %v426 = vsub.f32 0.0, %v410
        %v427 = vsub.f32 0.0, %v411
        %v428 = vsub.f32 0.0, %v412
        %v429 = vsub.f32 0.0, %v413
        %v430 = vsub.f32 0.0, %v414
        %v431 = vsub.f32 0.0, %v415
        %v432 = vsub.f32 0.0, %v416
        %v433 = vsub.f32 0.0, %v417
        %v434 = vsub.f32 0.0, %v418
        %v435 = vmul.f32 %v419, 1.442695
        %v436 = vpow.pop %v435
        %v437 = vmul.f32 %v420, 1.442695
        %v438 = vpow.pop %v437
        %v439 = vmul.f32 %v421, 1.442695
        %v440 = vpow.pop %v439
        %v441 = vmul.f32 %v422, 1.442695
        %v442 = vpow.pop %v441
        %v443 = vmul.f32 %v423, 1.442695
        %v444 = vpow.pop %v443
        %v445 = vmul.f32 %v424, 1.442695
        %v446 = vpow.pop %v445
        %v447 = vmul.f32 %v425, 1.442695
        %v448 = vpow.pop %v447
        %v449 = vmul.f32 %v426, 1.442695
        %v450 = vpow.pop %v449
        %v451 = vmul.f32 %v427, 1.442695
        %v452 = vpow.pop %v451
        %v453 = vmul.f32 %v428, 1.442695
        %v454 = vpow.pop %v453
        %v455 = vmul.f32 %v429, 1.442695
        %v456 = vpow.pop %v455
        %v457 = vmul.f32 %v430, 1.442695
        %v458 = vpow.pop %v457
        %v459 = vmul.f32 %v431, 1.442695
        %v460 = vpow.pop %v459
        %v461 = vmul.f32 %v432, 1.442695
        %v462 = vpow.pop %v461
        %v463 = vmul.f32 %v433, 1.442695
        %v464 = vpow.pop %v463
        %v465 = vmul.f32 %v434, 1.442695
        %v466 = vpow.pop %v465
        %v467 = vadd.f32 %v436, 1.0
        %v468 = vlog2.pop %v467
        %v469 = vmul.f32 %v468, 0.6931472
        %v470 = vmul.f32 -0.5, %v436
        %v471 = vadd.f32 %v470, 1.0
        %v472 = vmul.f32 %v471, %v436
        %v473 = vand.u32 2147483647, %v436
        %vm474 = vcmp.lt.f32.partialorder %v473, 0.0004427343
        %v475 = vsel %vm474, %v472, %v469
        %v476 = vadd.f32 %v438, 1.0
        %v477 = vlog2.pop %v476
        %v478 = vmul.f32 %v477, 0.6931472
        %v479 = vmul.f32 -0.5, %v438
        %v480 = vadd.f32 %v479, 1.0
        %v481 = vmul.f32 %v480, %v438
        %v482 = vand.u32 2147483647, %v438
        %vm483 = vcmp.lt.f32.partialorder %v482, 0.0004427343
        %v484 = vsel %vm483, %v481, %v478
        %v485 = vadd.f32 %v440, 1.0
        %v486 = vlog2.pop %v485
        %v487 = vmul.f32 %v486, 0.6931472
        %v488 = vmul.f32 -0.5, %v440
        %v489 = vadd.f32 %v488, 1.0
        %v490 = vmul.f32 %v489, %v440
        %v491 = vand.u32 2147483647, %v440
        %vm492 = vcmp.lt.f32.partialorder %v491, 0.0004427343
        %v493 = vsel %vm492, %v490, %v487
        %v494 = vadd.f32 %v442, 1.0
        %v495 = vlog2.pop %v494
        %v496 = vmul.f32 %v495, 0.6931472
        %v497 = vmul.f32 -0.5, %v442
        %v498 = vadd.f32 %v497, 1.0
        %v499 = vmul.f32 %v498, %v442
        %v500 = vand.u32 2147483647, %v442
        %vm501 = vcmp.lt.f32.partialorder %v500, 0.0004427343
        %v502 = vsel %vm501, %v499, %v496
        %v503 = vadd.f32 %v444, 1.0
        %v504 = vlog2.pop %v503
        %v505 = vmul.f32 %v504, 0.6931472
        %v506 = vmul.f32 -0.5, %v444
        %v507 = vadd.f32 %v506, 1.0
        %v508 = vmul.f32 %v507, %v444
        %v509 = vand.u32 2147483647, %v444
        %vm510 = vcmp.lt.f32.partialorder %v509, 0.0004427343
        %v511 = vsel %vm510, %v508, %v505
        %v512 = vadd.f32 %v446, 1.0
        %v513 = vlog2.pop %v512
        %v514 = vmul.f32 %v513, 0.6931472
        %v515 = vmul.f32 -0.5, %v446
        %v516 = vadd.f32 %v515, 1.0
        %v517 = vmul.f32 %v516, %v446
        %v518 = vand.u32 2147483647, %v446
        %vm519 = vcmp.lt.f32.partialorder %v518, 0.0004427343
        %v520 = vsel %vm519, %v517, %v514
        %v521 = vadd.f32 %v448, 1.0
        %v522 = vlog2.pop %v521
        %v523 = vmul.f32 %v522, 0.6931472
        %v524 = vmul.f32 -0.5, %v448
        %v525 = vadd.f32 %v524, 1.0
        %v526 = vmul.f32 %v525, %v448
        %v527 = vand.u32 2147483647, %v448
        %vm528 = vcmp.lt.f32.partialorder %v527, 0.0004427343
        %v529 = vsel %vm528, %v526, %v523
        %v530 = vadd.f32 %v450, 1.0
        %v531 = vlog2.pop %v530
        %v532 = vmul.f32 %v531, 0.6931472
        %v533 = vmul.f32 -0.5, %v450
        %v534 = vadd.f32 %v533, 1.0
        %v535 = vmul.f32 %v534, %v450
        %v536 = vand.u32 2147483647, %v450
        %vm537 = vcmp.lt.f32.partialorder %v536, 0.0004427343
        %v538 = vsel %vm537, %v535, %v532
        %v539 = vadd.f32 %v452, 1.0
        %v540 = vlog2.pop %v539
        %v541 = vmul.f32 %v540, 0.6931472
        %v542 = vmul.f32 -0.5, %v452
        %v543 = vadd.f32 %v542, 1.0
        %v544 = vmul.f32 %v543, %v452
        %v545 = vand.u32 2147483647, %v452
        %vm546 = vcmp.lt.f32.partialorder %v545, 0.0004427343
        %v547 = vsel %vm546, %v544, %v541
        %v548 = vadd.f32 %v454, 1.0
        %v549 = vlog2.pop %v548
        %v550 = vmul.f32 %v549, 0.6931472
        %v551 = vmul.f32 -0.5, %v454
        %v552 = vadd.f32 %v551, 1.0
        %v553 = vmul.f32 %v552, %v454
        %v554 = vand.u32 2147483647, %v454
        %vm555 = vcmp.lt.f32.partialorder %v554, 0.0004427343
        %v556 = vsel %vm555, %v553, %v550
        %v557 = vadd.f32 %v456, 1.0
        %v558 = vlog2.pop %v557
        %v559 = vmul.f32 %v558, 0.6931472
        %v560 = vmul.f32 -0.5, %v456
        %v561 = vadd.f32 %v560, 1.0
        %v562 = vmul.f32 %v561, %v456
        %v563 = vand.u32 2147483647, %v456
        %vm564 = vcmp.lt.f32.partialorder %v563, 0.0004427343
        %v565 = vsel %vm564, %v562, %v559
        %v566 = vadd.f32 %v458, 1.0
        %v567 = vlog2.pop %v566
        %v568 = vmul.f32 %v567, 0.6931472
        %v569 = vmul.f32 -0.5, %v458
        %v570 = vadd.f32 %v569, 1.0
        %v571 = vmul.f32 %v570, %v458
        %v572 = vand.u32 2147483647, %v458
        %vm573 = vcmp.lt.f32.partialorder %v572, 0.0004427343
        %v574 = vsel %vm573, %v571, %v568
        %v575 = vadd.f32 %v460, 1.0
        %v576 = vlog2.pop %v575
        %v577 = vmul.f32 %v576, 0.6931472
        %v578 = vmul.f32 -0.5, %v460
        %v579 = vadd.f32 %v578, 1.0
        %v580 = vmul.f32 %v579, %v460
        %v581 = vand.u32 2147483647, %v460
        %vm582 = vcmp.lt.f32.partialorder %v581, 0.0004427343
        %v583 = vsel %vm582, %v580, %v577
        %v584 = vadd.f32 %v462, 1.0
        %v585 = vlog2.pop %v584
        %v586 = vmul.f32 %v585, 0.6931472
        %v587 = vmul.f32 -0.5, %v462
        %v588 = vadd.f32 %v587, 1.0
        %v589 = vmul.f32 %v588, %v462
        %v590 = vand.u32 2147483647, %v462
        %vm591 = vcmp.lt.f32.partialorder %v590, 0.0004427343
        %v592 = vsel %vm591, %v589, %v586
        %v593 = vadd.f32 %v464, 1.0
        %v594 = vlog2.pop %v593
        %v595 = vmul.f32 %v594, 0.6931472
        %v596 = vmul.f32 -0.5, %v464
        %v597 = vadd.f32 %v596, 1.0
        %v598 = vmul.f32 %v597, %v464
        %v599 = vand.u32 2147483647, %v464
        %vm600 = vcmp.lt.f32.partialorder %v599, 0.0004427343
        %v601 = vsel %vm600, %v598, %v595
        %v602 = vadd.f32 %v466, 1.0
        %v603 = vlog2.pop %v602
        %v604 = vmul.f32 %v603, 0.6931472
        %v605 = vmul.f32 -0.5, %v466
        %v606 = vadd.f32 %v605, 1.0
        %v607 = vmul.f32 %v606, %v466
        %v608 = vand.u32 2147483647, %v466
        %vm609 = vcmp.lt.f32.partialorder %v608, 0.0004427343
        %v610 = vsel %vm609, %v607, %v604
        %v611 = vsub.f32 %v387, %v475
        %v612 = vsub.f32 %v388, %v484
        %v613 = vsub.f32 %v389, %v493
        %v614 = vsub.f32 %v390, %v502
        %v615 = vsub.f32 %v391, %v511
        %v616 = vsub.f32 %v392, %v520
        %v617 = vsub.f32 %v393, %v529
        %v618 = vsub.f32 %v394, %v538
        %v619 = vsub.f32 %v395, %v547
        %v620 = vsub.f32 %v396, %v556
        %v621 = vsub.f32 %v397, %v565
        %v622 = vsub.f32 %v398, %v574
        %v623 = vsub.f32 %v399, %v583
        %v624 = vsub.f32 %v400, %v592
        %v625 = vsub.f32 %v401, %v601
        %v626 = vsub.f32 %v402, %v610
        %v627 = vmul.f32 %v306, %v274
        %v628 = vmul.f32 %v307, %v275
        %v629 = vmul.f32 %v308, %v276
        %v630 = vmul.f32 %v309, %v277
        %v631 = vmul.f32 %v310, %v278
        %v632 = vmul.f32 %v311, %v279
        %v633 = vmul.f32 %v312, %v280
        %v634 = vmul.f32 %v313, %v281
        %v635 = vmul.f32 %v314, %v282
        %v636 = vmul.f32 %v315, %v283
        %v637 = vmul.f32 %v316, %v284
        %v638 = vmul.f32 %v317, %v285
        %v639 = vmul.f32 %v318, %v286
        %v640 = vmul.f32 %v319, %v287
        %v641 = vmul.f32 %v320, %v288
        %v642 = vmul.f32 %v321, %v289
        %v643 = vsel %vm338, %v627, 0.0
        %644 = vadd.xlane.f32.xlu0 %v643
        %v645 = vpop.xlane.xlu0 %644
        %v646 = vsel %vm338, %v628, 0.0
        %647 = vadd.xlane.f32.xlu0 %v646
        %v648 = vpop.xlane.xlu0 %647
        %v649 = vsel %vm338, %v629, 0.0
        %650 = vadd.xlane.f32.xlu0 %v649
        %v651 = vpop.xlane.xlu0 %650
        %v652 = vsel %vm338, %v630, 0.0
        %653 = vadd.xlane.f32.xlu0 %v652
        %v654 = vpop.xlane.xlu0 %653
        %v655 = vsel %vm338, %v631, 0.0
        %656 = vadd.xlane.f32.xlu0 %v655
        %v657 = vpop.xlane.xlu0 %656
        %v658 = vsel %vm338, %v632, 0.0
        %659 = vadd.xlane.f32.xlu0 %v658
        %v660 = vpop.xlane.xlu0 %659
        %v661 = vsel %vm338, %v633, 0.0
        %662 = vadd.xlane.f32.xlu0 %v661
        %v663 = vpop.xlane.xlu0 %662
        %v664 = vsel %vm338, %v634, 0.0
        %665 = vadd.xlane.f32.xlu0 %v664
        %v666 = vpop.xlane.xlu0 %665
        %v667 = vsel %vm338, %v635, 0.0
        %668 = vadd.xlane.f32.xlu0 %v667
        %v669 = vpop.xlane.xlu0 %668
        %v670 = vsel %vm338, %v636, 0.0
        %671 = vadd.xlane.f32.xlu0 %v670
        %v672 = vpop.xlane.xlu0 %671
        %v673 = vsel %vm338, %v637, 0.0
        %674 = vadd.xlane.f32.xlu0 %v673
        %v675 = vpop.xlane.xlu0 %674
        %v676 = vsel %vm338, %v638, 0.0
        %677 = vadd.xlane.f32.xlu0 %v676
        %v678 = vpop.xlane.xlu0 %677
        %v679 = vsel %vm338, %v639, 0.0
        %680 = vadd.xlane.f32.xlu0 %v679
        %v681 = vpop.xlane.xlu0 %680
        %v682 = vsel %vm338, %v640, 0.0
        %683 = vadd.xlane.f32.xlu0 %v682
        %v684 = vpop.xlane.xlu0 %683
        %v685 = vsel %vm338, %v641, 0.0
        %686 = vadd.xlane.f32.xlu0 %v685
        %v687 = vpop.xlane.xlu0 %686
        %v688 = vsel %vm338, %v642, 0.0
        %689 = vadd.xlane.f32.xlu0 %v688
        %v690 = vpop.xlane.xlu0 %689
        %v691 = vsub.f32 0.0, %v645
        %v692 = vsub.f32 0.0, %v648
        %v693 = vsub.f32 0.0, %v651
        %v694 = vsub.f32 0.0, %v654
        %v695 = vsub.f32 0.0, %v657
        %v696 = vsub.f32 0.0, %v660
        %v697 = vsub.f32 0.0, %v663
        %v698 = vsub.f32 0.0, %v666
        %v699 = vsub.f32 0.0, %v669
        %v700 = vsub.f32 0.0, %v672
        %v701 = vsub.f32 0.0, %v675
        %v702 = vsub.f32 0.0, %v678
        %v703 = vsub.f32 0.0, %v681
        %v704 = vsub.f32 0.0, %v684
        %v705 = vsub.f32 0.0, %v687
        %v706 = vsub.f32 0.0, %v690
        %v707 = vmin.f32 %v691, 0.0
        %v708 = vmin.f32 %v692, 0.0
        %v709 = vmin.f32 %v693, 0.0
        %v710 = vmin.f32 %v694, 0.0
        %v711 = vmin.f32 %v695, 0.0
        %v712 = vmin.f32 %v696, 0.0
        %v713 = vmin.f32 %v697, 0.0
        %v714 = vmin.f32 %v698, 0.0
        %v715 = vmin.f32 %v699, 0.0
        %v716 = vmin.f32 %v700, 0.0
        %v717 = vmin.f32 %v701, 0.0
        %v718 = vmin.f32 %v702, 0.0
        %v719 = vmin.f32 %v703, 0.0
        %v720 = vmin.f32 %v704, 0.0
        %v721 = vmin.f32 %v705, 0.0
        %v722 = vmin.f32 %v706, 0.0
        %v723 = vand.u32 2147483647, %v691
        %v724 = vand.u32 2147483647, %v692
        %v725 = vand.u32 2147483647, %v693
        %v726 = vand.u32 2147483647, %v694
        %v727 = vand.u32 2147483647, %v695
        %v728 = vand.u32 2147483647, %v696
        %v729 = vand.u32 2147483647, %v697
        %v730 = vand.u32 2147483647, %v698
        %v731 = vand.u32 2147483647, %v699
        %v732 = vand.u32 2147483647, %v700
        %v733 = vand.u32 2147483647, %v701
        %v734 = vand.u32 2147483647, %v702
        %v735 = vand.u32 2147483647, %v703
        %v736 = vand.u32 2147483647, %v704
        %v737 = vand.u32 2147483647, %v705
        %v738 = vand.u32 2147483647, %v706
        %v739 = vsub.f32 0.0, %v723
        %v740 = vsub.f32 0.0, %v724
        %v741 = vsub.f32 0.0, %v725
        %v742 = vsub.f32 0.0, %v726
        %v743 = vsub.f32 0.0, %v727
        %v744 = vsub.f32 0.0, %v728
        %v745 = vsub.f32 0.0, %v729
        %v746 = vsub.f32 0.0, %v730
        %v747 = vsub.f32 0.0, %v731
        %v748 = vsub.f32 0.0, %v732
        %v749 = vsub.f32 0.0, %v733
        %v750 = vsub.f32 0.0, %v734
        %v751 = vsub.f32 0.0, %v735
        %v752 = vsub.f32 0.0, %v736
        %v753 = vsub.f32 0.0, %v737
        %v754 = vsub.f32 0.0, %v738
        %v755 = vmul.f32 %v739, 1.442695
        %v756 = vpow.pop %v755
        %v757 = vmul.f32 %v740, 1.442695
        %v758 = vpow.pop %v757
        %v759 = vmul.f32 %v741, 1.442695
        %v760 = vpow.pop %v759
        %v761 = vmul.f32 %v742, 1.442695
        %v762 = vpow.pop %v761
        %v763 = vmul.f32 %v743, 1.442695
        %v764 = vpow.pop %v763
        %v765 = vmul.f32 %v744, 1.442695
        %v766 = vpow.pop %v765
        %v767 = vmul.f32 %v745, 1.442695
        %v768 = vpow.pop %v767
        %v769 = vmul.f32 %v746, 1.442695
        %v770 = vpow.pop %v769
        %v771 = vmul.f32 %v747, 1.442695
        %v772 = vpow.pop %v771
        %v773 = vmul.f32 %v748, 1.442695
        %v774 = vpow.pop %v773
        %v775 = vmul.f32 %v749, 1.442695
        %v776 = vpow.pop %v775
        %v777 = vmul.f32 %v750, 1.442695
        %v778 = vpow.pop %v777
        %v779 = vmul.f32 %v751, 1.442695
        %v780 = vpow.pop %v779
        %v781 = vmul.f32 %v752, 1.442695
        %v782 = vpow.pop %v781
        %v783 = vmul.f32 %v753, 1.442695
        %v784 = vpow.pop %v783
        %v785 = vmul.f32 %v754, 1.442695
        %v786 = vpow.pop %v785
        %v787 = vadd.f32 %v756, 1.0
        %v788 = vlog2.pop %v787
        %v789 = vmul.f32 %v788, 0.6931472
        %v790 = vmul.f32 -0.5, %v756
        %v791 = vadd.f32 %v790, 1.0
        %v792 = vmul.f32 %v791, %v756
        %v793 = vand.u32 2147483647, %v756
        %vm794 = vcmp.lt.f32.partialorder %v793, 0.0004427343
        %v795 = vsel %vm794, %v792, %v789
        %v796 = vadd.f32 %v758, 1.0
        %v797 = vlog2.pop %v796
        %v798 = vmul.f32 %v797, 0.6931472
        %v799 = vmul.f32 -0.5, %v758
        %v800 = vadd.f32 %v799, 1.0
        %v801 = vmul.f32 %v800, %v758
        %v802 = vand.u32 2147483647, %v758
        %vm803 = vcmp.lt.f32.partialorder %v802, 0.0004427343
        %v804 = vsel %vm803, %v801, %v798
        %v805 = vadd.f32 %v760, 1.0
        %v806 = vlog2.pop %v805
        %v807 = vmul.f32 %v806, 0.6931472
        %v808 = vmul.f32 -0.5, %v760
        %v809 = vadd.f32 %v808, 1.0
        %v810 = vmul.f32 %v809, %v760
        %v811 = vand.u32 2147483647, %v760
        %vm812 = vcmp.lt.f32.partialorder %v811, 0.0004427343
        %v813 = vsel %vm812, %v810, %v807
        %v814 = vadd.f32 %v762, 1.0
        %v815 = vlog2.pop %v814
        %v816 = vmul.f32 %v815, 0.6931472
        %v817 = vmul.f32 -0.5, %v762
        %v818 = vadd.f32 %v817, 1.0
        %v819 = vmul.f32 %v818, %v762
        %v820 = vand.u32 2147483647, %v762
        %vm821 = vcmp.lt.f32.partialorder %v820, 0.0004427343
        %v822 = vsel %vm821, %v819, %v816
        %v823 = vadd.f32 %v764, 1.0
        %v824 = vlog2.pop %v823
        %v825 = vmul.f32 %v824, 0.6931472
        %v826 = vmul.f32 -0.5, %v764
        %v827 = vadd.f32 %v826, 1.0
        %v828 = vmul.f32 %v827, %v764
        %v829 = vand.u32 2147483647, %v764
        %vm830 = vcmp.lt.f32.partialorder %v829, 0.0004427343
        %v831 = vsel %vm830, %v828, %v825
        %v832 = vadd.f32 %v766, 1.0
        %v833 = vlog2.pop %v832
        %v834 = vmul.f32 %v833, 0.6931472
        %v835 = vmul.f32 -0.5, %v766
        %v836 = vadd.f32 %v835, 1.0
        %v837 = vmul.f32 %v836, %v766
        %v838 = vand.u32 2147483647, %v766
        %vm839 = vcmp.lt.f32.partialorder %v838, 0.0004427343
        %v840 = vsel %vm839, %v837, %v834
        %v841 = vadd.f32 %v768, 1.0
        %v842 = vlog2.pop %v841
        %v843 = vmul.f32 %v842, 0.6931472
        %v844 = vmul.f32 -0.5, %v768
        %v845 = vadd.f32 %v844, 1.0
        %v846 = vmul.f32 %v845, %v768
        %v847 = vand.u32 2147483647, %v768
        %vm848 = vcmp.lt.f32.partialorder %v847, 0.0004427343
        %v849 = vsel %vm848, %v846, %v843
        %v850 = vadd.f32 %v770, 1.0
        %v851 = vlog2.pop %v850
        %v852 = vmul.f32 %v851, 0.6931472
        %v853 = vmul.f32 -0.5, %v770
        %v854 = vadd.f32 %v853, 1.0
        %v855 = vmul.f32 %v854, %v770
        %v856 = vand.u32 2147483647, %v770
        %vm857 = vcmp.lt.f32.partialorder %v856, 0.0004427343
        %v858 = vsel %vm857, %v855, %v852
        %v859 = vadd.f32 %v772, 1.0
        %v860 = vlog2.pop %v859
        %v861 = vmul.f32 %v860, 0.6931472
        %v862 = vmul.f32 -0.5, %v772
        %v863 = vadd.f32 %v862, 1.0
        %v864 = vmul.f32 %v863, %v772
        %v865 = vand.u32 2147483647, %v772
        %vm866 = vcmp.lt.f32.partialorder %v865, 0.0004427343
        %v867 = vsel %vm866, %v864, %v861
        %v868 = vadd.f32 %v774, 1.0
        %v869 = vlog2.pop %v868
        %v870 = vmul.f32 %v869, 0.6931472
        %v871 = vmul.f32 -0.5, %v774
        %v872 = vadd.f32 %v871, 1.0
        %v873 = vmul.f32 %v872, %v774
        %v874 = vand.u32 2147483647, %v774
        %vm875 = vcmp.lt.f32.partialorder %v874, 0.0004427343
        %v876 = vsel %vm875, %v873, %v870
        %v877 = vadd.f32 %v776, 1.0
        %v878 = vlog2.pop %v877
        %v879 = vmul.f32 %v878, 0.6931472
        %v880 = vmul.f32 -0.5, %v776
        %v881 = vadd.f32 %v880, 1.0
        %v882 = vmul.f32 %v881, %v776
        %v883 = vand.u32 2147483647, %v776
        %vm884 = vcmp.lt.f32.partialorder %v883, 0.0004427343
        %v885 = vsel %vm884, %v882, %v879
        %v886 = vadd.f32 %v778, 1.0
        %v887 = vlog2.pop %v886
        %v888 = vmul.f32 %v887, 0.6931472
        %v889 = vmul.f32 -0.5, %v778
        %v890 = vadd.f32 %v889, 1.0
        %v891 = vmul.f32 %v890, %v778
        %v892 = vand.u32 2147483647, %v778
        %vm893 = vcmp.lt.f32.partialorder %v892, 0.0004427343
        %v894 = vsel %vm893, %v891, %v888
        %v895 = vadd.f32 %v780, 1.0
        %v896 = vlog2.pop %v895
        %v897 = vmul.f32 %v896, 0.6931472
        %v898 = vmul.f32 -0.5, %v780
        %v899 = vadd.f32 %v898, 1.0
        %v900 = vmul.f32 %v899, %v780
        %v901 = vand.u32 2147483647, %v780
        %vm902 = vcmp.lt.f32.partialorder %v901, 0.0004427343
        %v903 = vsel %vm902, %v900, %v897
        %v904 = vadd.f32 %v782, 1.0
        %v905 = vlog2.pop %v904
        %v906 = vmul.f32 %v905, 0.6931472
        %v907 = vmul.f32 -0.5, %v782
        %v908 = vadd.f32 %v907, 1.0
        %v909 = vmul.f32 %v908, %v782
        %v910 = vand.u32 2147483647, %v782
        %vm911 = vcmp.lt.f32.partialorder %v910, 0.0004427343
        %v912 = vsel %vm911, %v909, %v906
        %v913 = vadd.f32 %v784, 1.0
        %v914 = vlog2.pop %v913
        %v915 = vmul.f32 %v914, 0.6931472
        %v916 = vmul.f32 -0.5, %v784
        %v917 = vadd.f32 %v916, 1.0
        %v918 = vmul.f32 %v917, %v784
        %v919 = vand.u32 2147483647, %v784
        %vm920 = vcmp.lt.f32.partialorder %v919, 0.0004427343
        %v921 = vsel %vm920, %v918, %v915
        %v922 = vadd.f32 %v786, 1.0
        %v923 = vlog2.pop %v922
        %v924 = vmul.f32 %v923, 0.6931472
        %v925 = vmul.f32 -0.5, %v786
        %v926 = vadd.f32 %v925, 1.0
        %v927 = vmul.f32 %v926, %v786
        %v928 = vand.u32 2147483647, %v786
        %vm929 = vcmp.lt.f32.partialorder %v928, 0.0004427343
        %v930 = vsel %vm929, %v927, %v924
        %v931 = vsub.f32 %v707, %v795
        %v932 = vsub.f32 %v708, %v804
        %v933 = vsub.f32 %v709, %v813
        %v934 = vsub.f32 %v710, %v822
        %v935 = vsub.f32 %v711, %v831
        %v936 = vsub.f32 %v712, %v840
        %v937 = vsub.f32 %v713, %v849
        %v938 = vsub.f32 %v714, %v858
        %v939 = vsub.f32 %v715, %v867
        %v940 = vsub.f32 %v716, %v876
        %v941 = vsub.f32 %v717, %v885
        %v942 = vsub.f32 %v718, %v894
        %v943 = vsub.f32 %v719, %v903
        %v944 = vsub.f32 %v720, %v912
        %v945 = vsub.f32 %v721, %v921
        %v946 = vsub.f32 %v722, %v930
        %v947 = vadd.f32 %v611, %v931
        %v948 = vadd.f32 %v612, %v932
        %v949 = vadd.f32 %v613, %v933
        %v950 = vadd.f32 %v614, %v934
        %v951 = vadd.f32 %v615, %v935
        %v952 = vadd.f32 %v616, %v936
        %v953 = vadd.f32 %v617, %v937
        %v954 = vadd.f32 %v618, %v938
        %v955 = vadd.f32 %v619, %v939
        %v956 = vadd.f32 %v620, %v940
        %v957 = vadd.f32 %v621, %v941
        %v958 = vadd.f32 %v622, %v942
        %v959 = vadd.f32 %v623, %v943
        %v960 = vadd.f32 %v624, %v944
        %v961 = vadd.f32 %v625, %v945
        %v962 = vadd.f32 %v626, %v946
        %979 = vrot.lane.b32.xlu0 %v274, 10
        %v980 = vpop.permute.xlu0 %979
        %981 = vrot.lane.b32.xlu0 %v275, 10
        %v982 = vpop.permute.xlu0 %981
        %983 = vrot.lane.b32.xlu0 %v276, 10
        %v984 = vpop.permute.xlu0 %983
        %985 = vrot.lane.b32.xlu0 %v277, 10
        %v986 = vpop.permute.xlu0 %985
        %987 = vrot.lane.b32.xlu0 %v278, 10
        %v988 = vpop.permute.xlu0 %987
        %989 = vrot.lane.b32.xlu0 %v279, 10
        %v990 = vpop.permute.xlu0 %989
        %991 = vrot.lane.b32.xlu0 %v280, 10
        %v992 = vpop.permute.xlu0 %991
        %993 = vrot.lane.b32.xlu0 %v281, 10
        %v994 = vpop.permute.xlu0 %993
        %995 = vrot.lane.b32.xlu0 %v282, 10
        %v996 = vpop.permute.xlu0 %995
        %997 = vrot.lane.b32.xlu0 %v283, 10
        %v998 = vpop.permute.xlu0 %997
        %999 = vrot.lane.b32.xlu0 %v284, 10
        %v1000 = vpop.permute.xlu0 %999
        %1001 = vrot.lane.b32.xlu0 %v285, 10
        %v1002 = vpop.permute.xlu0 %1001
        %1003 = vrot.lane.b32.xlu0 %v286, 10
        %v1004 = vpop.permute.xlu0 %1003
        %1005 = vrot.lane.b32.xlu0 %v287, 10
        %v1006 = vpop.permute.xlu0 %1005
        %1007 = vrot.lane.b32.xlu0 %v288, 10
        %v1008 = vpop.permute.xlu0 %1007
        %1009 = vrot.lane.b32.xlu0 %v289, 10
        %v1010 = vpop.permute.xlu0 %1009
        %v1027 = vmul.f32 %v306, %v980
        %v1028 = vmul.f32 %v307, %v982
        %v1029 = vmul.f32 %v308, %v984
        %v1030 = vmul.f32 %v309, %v986
        %v1031 = vmul.f32 %v310, %v988
        %v1032 = vmul.f32 %v311, %v990
        %v1033 = vmul.f32 %v312, %v992
        %v1034 = vmul.f32 %v313, %v994
        %v1035 = vmul.f32 %v314, %v996
        %v1036 = vmul.f32 %v315, %v998
        %v1037 = vmul.f32 %v316, %v1000
        %v1038 = vmul.f32 %v317, %v1002
        %v1039 = vmul.f32 %v318, %v1004
        %v1040 = vmul.f32 %v319, %v1006
        %v1041 = vmul.f32 %v320, %v1008
        %v1042 = vmul.f32 %v321, %v1010
        %1059 = vrot.lane.b32.xlu0 %v1027, 118
        %v1060 = vpop.permute.xlu0 %1059
        %1061 = vrot.lane.b32.xlu0 %v1028, 118
        %v1062 = vpop.permute.xlu0 %1061
        %1063 = vrot.lane.b32.xlu0 %v1029, 118
        %v1064 = vpop.permute.xlu0 %1063
        %1065 = vrot.lane.b32.xlu0 %v1030, 118
        %v1066 = vpop.permute.xlu0 %1065
        %1067 = vrot.lane.b32.xlu0 %v1031, 118
        %v1068 = vpop.permute.xlu0 %1067
        %1069 = vrot.lane.b32.xlu0 %v1032, 118
        %v1070 = vpop.permute.xlu0 %1069
        %1071 = vrot.lane.b32.xlu0 %v1033, 118
        %v1072 = vpop.permute.xlu0 %1071
        %1073 = vrot.lane.b32.xlu0 %v1034, 118
        %v1074 = vpop.permute.xlu0 %1073
        %1075 = vrot.lane.b32.xlu0 %v1035, 118
        %v1076 = vpop.permute.xlu0 %1075
        %1077 = vrot.lane.b32.xlu0 %v1036, 118
        %v1078 = vpop.permute.xlu0 %1077
        %1079 = vrot.lane.b32.xlu0 %v1037, 118
        %v1080 = vpop.permute.xlu0 %1079
        %1081 = vrot.lane.b32.xlu0 %v1038, 118
        %v1082 = vpop.permute.xlu0 %1081
        %1083 = vrot.lane.b32.xlu0 %v1039, 118
        %v1084 = vpop.permute.xlu0 %1083
        %1085 = vrot.lane.b32.xlu0 %v1040, 118
        %v1086 = vpop.permute.xlu0 %1085
        %1087 = vrot.lane.b32.xlu0 %v1041, 118
        %v1088 = vpop.permute.xlu0 %1087
        %1089 = vrot.lane.b32.xlu0 %v1042, 118
        %v1090 = vpop.permute.xlu0 %1089
        %v1107 = vsel %vm338, %v1060, 0.0
        %1108 = vadd.xlane.f32.xlu0 %v1107
        %v1109 = vpop.xlane.xlu0 %1108
        %v1110 = vsel %vm338, %v1062, 0.0
        %1111 = vadd.xlane.f32.xlu0 %v1110
        %v1112 = vpop.xlane.xlu0 %1111
        %v1113 = vsel %vm338, %v1064, 0.0
        %1114 = vadd.xlane.f32.xlu0 %v1113
        %v1115 = vpop.xlane.xlu0 %1114
        %v1116 = vsel %vm338, %v1066, 0.0
        %1117 = vadd.xlane.f32.xlu0 %v1116
        %v1118 = vpop.xlane.xlu0 %1117
        %v1119 = vsel %vm338, %v1068, 0.0
        %1120 = vadd.xlane.f32.xlu0 %v1119
        %v1121 = vpop.xlane.xlu0 %1120
        %v1122 = vsel %vm338, %v1070, 0.0
        %1123 = vadd.xlane.f32.xlu0 %v1122
        %v1124 = vpop.xlane.xlu0 %1123
        %v1125 = vsel %vm338, %v1072, 0.0
        %1126 = vadd.xlane.f32.xlu0 %v1125
        %v1127 = vpop.xlane.xlu0 %1126
        %v1128 = vsel %vm338, %v1074, 0.0
        %1129 = vadd.xlane.f32.xlu0 %v1128
        %v1130 = vpop.xlane.xlu0 %1129
        %v1131 = vsel %vm338, %v1076, 0.0
        %1132 = vadd.xlane.f32.xlu0 %v1131
        %v1133 = vpop.xlane.xlu0 %1132
        %v1134 = vsel %vm338, %v1078, 0.0
        %1135 = vadd.xlane.f32.xlu0 %v1134
        %v1136 = vpop.xlane.xlu0 %1135
        %v1137 = vsel %vm338, %v1080, 0.0
        %1138 = vadd.xlane.f32.xlu0 %v1137
        %v1139 = vpop.xlane.xlu0 %1138
        %v1140 = vsel %vm338, %v1082, 0.0
        %1141 = vadd.xlane.f32.xlu0 %v1140
        %v1142 = vpop.xlane.xlu0 %1141
        %v1143 = vsel %vm338, %v1084, 0.0
        %1144 = vadd.xlane.f32.xlu0 %v1143
        %v1145 = vpop.xlane.xlu0 %1144
        %v1146 = vsel %vm338, %v1086, 0.0
        %1147 = vadd.xlane.f32.xlu0 %v1146
        %v1148 = vpop.xlane.xlu0 %1147
        %v1149 = vsel %vm338, %v1088, 0.0
        %1150 = vadd.xlane.f32.xlu0 %v1149
        %v1151 = vpop.xlane.xlu0 %1150
        %v1152 = vsel %vm338, %v1090, 0.0
        %1153 = vadd.xlane.f32.xlu0 %v1152
        %v1154 = vpop.xlane.xlu0 %1153
        %v1155 = vsub.f32 0.0, %v1109
        %v1156 = vsub.f32 0.0, %v1112
        %v1157 = vsub.f32 0.0, %v1115
        %v1158 = vsub.f32 0.0, %v1118
        %v1159 = vsub.f32 0.0, %v1121
        %v1160 = vsub.f32 0.0, %v1124
        %v1161 = vsub.f32 0.0, %v1127
        %v1162 = vsub.f32 0.0, %v1130
        %v1163 = vsub.f32 0.0, %v1133
        %v1164 = vsub.f32 0.0, %v1136
        %v1165 = vsub.f32 0.0, %v1139
        %v1166 = vsub.f32 0.0, %v1142
        %v1167 = vsub.f32 0.0, %v1145
        %v1168 = vsub.f32 0.0, %v1148
        %v1169 = vsub.f32 0.0, %v1151
        %v1170 = vsub.f32 0.0, %v1154
        %v1171 = vmin.f32 %v1155, 0.0
        %v1172 = vmin.f32 %v1156, 0.0
        %v1173 = vmin.f32 %v1157, 0.0
        %v1174 = vmin.f32 %v1158, 0.0
        %v1175 = vmin.f32 %v1159, 0.0
        %v1176 = vmin.f32 %v1160, 0.0
        %v1177 = vmin.f32 %v1161, 0.0
        %v1178 = vmin.f32 %v1162, 0.0
        %v1179 = vmin.f32 %v1163, 0.0
        %v1180 = vmin.f32 %v1164, 0.0
        %v1181 = vmin.f32 %v1165, 0.0
        %v1182 = vmin.f32 %v1166, 0.0
        %v1183 = vmin.f32 %v1167, 0.0
        %v1184 = vmin.f32 %v1168, 0.0
        %v1185 = vmin.f32 %v1169, 0.0
        %v1186 = vmin.f32 %v1170, 0.0
        %v1187 = vand.u32 2147483647, %v1155
        %v1188 = vand.u32 2147483647, %v1156
        %v1189 = vand.u32 2147483647, %v1157
        %v1190 = vand.u32 2147483647, %v1158
        %v1191 = vand.u32 2147483647, %v1159
        %v1192 = vand.u32 2147483647, %v1160
        %v1193 = vand.u32 2147483647, %v1161
        %v1194 = vand.u32 2147483647, %v1162
        %v1195 = vand.u32 2147483647, %v1163
        %v1196 = vand.u32 2147483647, %v1164
        %v1197 = vand.u32 2147483647, %v1165
        %v1198 = vand.u32 2147483647, %v1166
        %v1199 = vand.u32 2147483647, %v1167
        %v1200 = vand.u32 2147483647, %v1168
        %v1201 = vand.u32 2147483647, %v1169
        %v1202 = vand.u32 2147483647, %v1170
        %v1203 = vsub.f32 0.0, %v1187
        %v1204 = vsub.f32 0.0, %v1188
        %v1205 = vsub.f32 0.0, %v1189
        %v1206 = vsub.f32 0.0, %v1190
        %v1207 = vsub.f32 0.0, %v1191
        %v1208 = vsub.f32 0.0, %v1192
        %v1209 = vsub.f32 0.0, %v1193
        %v1210 = vsub.f32 0.0, %v1194
        %v1211 = vsub.f32 0.0, %v1195
        %v1212 = vsub.f32 0.0, %v1196
        %v1213 = vsub.f32 0.0, %v1197
        %v1214 = vsub.f32 0.0, %v1198
        %v1215 = vsub.f32 0.0, %v1199
        %v1216 = vsub.f32 0.0, %v1200
        %v1217 = vsub.f32 0.0, %v1201
        %v1218 = vsub.f32 0.0, %v1202
        %v1219 = vmul.f32 %v1203, 1.442695
        %v1220 = vpow.pop %v1219
        %v1221 = vmul.f32 %v1204, 1.442695
        %v1222 = vpow.pop %v1221
        %v1223 = vmul.f32 %v1205, 1.442695
        %v1224 = vpow.pop %v1223
        %v1225 = vmul.f32 %v1206, 1.442695
        %v1226 = vpow.pop %v1225
        %v1227 = vmul.f32 %v1207, 1.442695
        %v1228 = vpow.pop %v1227
        %v1229 = vmul.f32 %v1208, 1.442695
        %v1230 = vpow.pop %v1229
        %v1231 = vmul.f32 %v1209, 1.442695
        %v1232 = vpow.pop %v1231
        %v1233 = vmul.f32 %v1210, 1.442695
        %v1234 = vpow.pop %v1233
        %v1235 = vmul.f32 %v1211, 1.442695
        %v1236 = vpow.pop %v1235
        %v1237 = vmul.f32 %v1212, 1.442695
        %v1238 = vpow.pop %v1237
        %v1239 = vmul.f32 %v1213, 1.442695
        %v1240 = vpow.pop %v1239
        %v1241 = vmul.f32 %v1214, 1.442695
        %v1242 = vpow.pop %v1241
        %v1243 = vmul.f32 %v1215, 1.442695
        %v1244 = vpow.pop %v1243
        %v1245 = vmul.f32 %v1216, 1.442695
        %v1246 = vpow.pop %v1245
        %v1247 = vmul.f32 %v1217, 1.442695
        %v1248 = vpow.pop %v1247
        %v1249 = vmul.f32 %v1218, 1.442695
        %v1250 = vpow.pop %v1249
        %v1251 = vadd.f32 %v1220, 1.0
        %v1252 = vlog2.pop %v1251
        %v1253 = vmul.f32 %v1252, 0.6931472
        %v1254 = vmul.f32 -0.5, %v1220
        %v1255 = vadd.f32 %v1254, 1.0
        %v1256 = vmul.f32 %v1255, %v1220
        %v1257 = vand.u32 2147483647, %v1220
        %vm1258 = vcmp.lt.f32.partialorder %v1257, 0.0004427343
        %v1259 = vsel %vm1258, %v1256, %v1253
        %v1260 = vadd.f32 %v1222, 1.0
        %v1261 = vlog2.pop %v1260
        %v1262 = vmul.f32 %v1261, 0.6931472
        %v1263 = vmul.f32 -0.5, %v1222
        %v1264 = vadd.f32 %v1263, 1.0
        %v1265 = vmul.f32 %v1264, %v1222
        %v1266 = vand.u32 2147483647, %v1222
        %vm1267 = vcmp.lt.f32.partialorder %v1266, 0.0004427343
        %v1268 = vsel %vm1267, %v1265, %v1262
        %v1269 = vadd.f32 %v1224, 1.0
        %v1270 = vlog2.pop %v1269
        %v1271 = vmul.f32 %v1270, 0.6931472
        %v1272 = vmul.f32 -0.5, %v1224
        %v1273 = vadd.f32 %v1272, 1.0
        %v1274 = vmul.f32 %v1273, %v1224
        %v1275 = vand.u32 2147483647, %v1224
        %vm1276 = vcmp.lt.f32.partialorder %v1275, 0.0004427343
        %v1277 = vsel %vm1276, %v1274, %v1271
        %v1278 = vadd.f32 %v1226, 1.0
        %v1279 = vlog2.pop %v1278
        %v1280 = vmul.f32 %v1279, 0.6931472
        %v1281 = vmul.f32 -0.5, %v1226
        %v1282 = vadd.f32 %v1281, 1.0
        %v1283 = vmul.f32 %v1282, %v1226
        %v1284 = vand.u32 2147483647, %v1226
        %vm1285 = vcmp.lt.f32.partialorder %v1284, 0.0004427343
        %v1286 = vsel %vm1285, %v1283, %v1280
        %v1287 = vadd.f32 %v1228, 1.0
        %v1288 = vlog2.pop %v1287
        %v1289 = vmul.f32 %v1288, 0.6931472
        %v1290 = vmul.f32 -0.5, %v1228
        %v1291 = vadd.f32 %v1290, 1.0
        %v1292 = vmul.f32 %v1291, %v1228
        %v1293 = vand.u32 2147483647, %v1228
        %vm1294 = vcmp.lt.f32.partialorder %v1293, 0.0004427343
        %v1295 = vsel %vm1294, %v1292, %v1289
        %v1296 = vadd.f32 %v1230, 1.0
        %v1297 = vlog2.pop %v1296
        %v1298 = vmul.f32 %v1297, 0.6931472
        %v1299 = vmul.f32 -0.5, %v1230
        %v1300 = vadd.f32 %v1299, 1.0
        %v1301 = vmul.f32 %v1300, %v1230
        %v1302 = vand.u32 2147483647, %v1230
        %vm1303 = vcmp.lt.f32.partialorder %v1302, 0.0004427343
        %v1304 = vsel %vm1303, %v1301, %v1298
        %v1305 = vadd.f32 %v1232, 1.0
        %v1306 = vlog2.pop %v1305
        %v1307 = vmul.f32 %v1306, 0.6931472
        %v1308 = vmul.f32 -0.5, %v1232
        %v1309 = vadd.f32 %v1308, 1.0
        %v1310 = vmul.f32 %v1309, %v1232
        %v1311 = vand.u32 2147483647, %v1232
        %vm1312 = vcmp.lt.f32.partialorder %v1311, 0.0004427343
        %v1313 = vsel %vm1312, %v1310, %v1307
        %v1314 = vadd.f32 %v1234, 1.0
        %v1315 = vlog2.pop %v1314
        %v1316 = vmul.f32 %v1315, 0.6931472
        %v1317 = vmul.f32 -0.5, %v1234
        %v1318 = vadd.f32 %v1317, 1.0
        %v1319 = vmul.f32 %v1318, %v1234
        %v1320 = vand.u32 2147483647, %v1234
        %vm1321 = vcmp.lt.f32.partialorder %v1320, 0.0004427343
        %v1322 = vsel %vm1321, %v1319, %v1316
        %v1323 = vadd.f32 %v1236, 1.0
        %v1324 = vlog2.pop %v1323
        %v1325 = vmul.f32 %v1324, 0.6931472
        %v1326 = vmul.f32 -0.5, %v1236
        %v1327 = vadd.f32 %v1326, 1.0
        %v1328 = vmul.f32 %v1327, %v1236
        %v1329 = vand.u32 2147483647, %v1236
        %vm1330 = vcmp.lt.f32.partialorder %v1329, 0.0004427343
        %v1331 = vsel %vm1330, %v1328, %v1325
        %v1332 = vadd.f32 %v1238, 1.0
        %v1333 = vlog2.pop %v1332
        %v1334 = vmul.f32 %v1333, 0.6931472
        %v1335 = vmul.f32 -0.5, %v1238
        %v1336 = vadd.f32 %v1335, 1.0
        %v1337 = vmul.f32 %v1336, %v1238
        %v1338 = vand.u32 2147483647, %v1238
        %vm1339 = vcmp.lt.f32.partialorder %v1338, 0.0004427343
        %v1340 = vsel %vm1339, %v1337, %v1334
        %v1341 = vadd.f32 %v1240, 1.0
        %v1342 = vlog2.pop %v1341
        %v1343 = vmul.f32 %v1342, 0.6931472
        %v1344 = vmul.f32 -0.5, %v1240
        %v1345 = vadd.f32 %v1344, 1.0
        %v1346 = vmul.f32 %v1345, %v1240
        %v1347 = vand.u32 2147483647, %v1240
        %vm1348 = vcmp.lt.f32.partialorder %v1347, 0.0004427343
        %v1349 = vsel %vm1348, %v1346, %v1343
        %v1350 = vadd.f32 %v1242, 1.0
        %v1351 = vlog2.pop %v1350
        %v1352 = vmul.f32 %v1351, 0.6931472
        %v1353 = vmul.f32 -0.5, %v1242
        %v1354 = vadd.f32 %v1353, 1.0
        %v1355 = vmul.f32 %v1354, %v1242
        %v1356 = vand.u32 2147483647, %v1242
        %vm1357 = vcmp.lt.f32.partialorder %v1356, 0.0004427343
        %v1358 = vsel %vm1357, %v1355, %v1352
        %v1359 = vadd.f32 %v1244, 1.0
        %v1360 = vlog2.pop %v1359
        %v1361 = vmul.f32 %v1360, 0.6931472
        %v1362 = vmul.f32 -0.5, %v1244
        %v1363 = vadd.f32 %v1362, 1.0
        %v1364 = vmul.f32 %v1363, %v1244
        %v1365 = vand.u32 2147483647, %v1244
        %vm1366 = vcmp.lt.f32.partialorder %v1365, 0.0004427343
        %v1367 = vsel %vm1366, %v1364, %v1361
        %v1368 = vadd.f32 %v1246, 1.0
        %v1369 = vlog2.pop %v1368
        %v1370 = vmul.f32 %v1369, 0.6931472
        %v1371 = vmul.f32 -0.5, %v1246
        %v1372 = vadd.f32 %v1371, 1.0
        %v1373 = vmul.f32 %v1372, %v1246
        %v1374 = vand.u32 2147483647, %v1246
        %vm1375 = vcmp.lt.f32.partialorder %v1374, 0.0004427343
        %v1376 = vsel %vm1375, %v1373, %v1370
        %v1377 = vadd.f32 %v1248, 1.0
        %v1378 = vlog2.pop %v1377
        %v1379 = vmul.f32 %v1378, 0.6931472
        %v1380 = vmul.f32 -0.5, %v1248
        %v1381 = vadd.f32 %v1380, 1.0
        %v1382 = vmul.f32 %v1381, %v1248
        %v1383 = vand.u32 2147483647, %v1248
        %vm1384 = vcmp.lt.f32.partialorder %v1383, 0.0004427343
        %v1385 = vsel %vm1384, %v1382, %v1379
        %v1386 = vadd.f32 %v1250, 1.0
        %v1387 = vlog2.pop %v1386
        %v1388 = vmul.f32 %v1387, 0.6931472
        %v1389 = vmul.f32 -0.5, %v1250
        %v1390 = vadd.f32 %v1389, 1.0
        %v1391 = vmul.f32 %v1390, %v1250
        %v1392 = vand.u32 2147483647, %v1250
        %vm1393 = vcmp.lt.f32.partialorder %v1392, 0.0004427343
        %v1394 = vsel %vm1393, %v1391, %v1388
        %v1395 = vsub.f32 %v1171, %v1259
        %v1396 = vsub.f32 %v1172, %v1268
        %v1397 = vsub.f32 %v1173, %v1277
        %v1398 = vsub.f32 %v1174, %v1286
        %v1399 = vsub.f32 %v1175, %v1295
        %v1400 = vsub.f32 %v1176, %v1304
        %v1401 = vsub.f32 %v1177, %v1313
        %v1402 = vsub.f32 %v1178, %v1322
        %v1403 = vsub.f32 %v1179, %v1331
        %v1404 = vsub.f32 %v1180, %v1340
        %v1405 = vsub.f32 %v1181, %v1349
        %v1406 = vsub.f32 %v1182, %v1358
        %v1407 = vsub.f32 %v1183, %v1367
        %v1408 = vsub.f32 %v1184, %v1376
        %v1409 = vsub.f32 %v1185, %v1385
        %v1410 = vsub.f32 %v1186, %v1394
        %v1411 = vadd.f32 %v947, %v1395
        %v1412 = vadd.f32 %v948, %v1396
        %v1413 = vadd.f32 %v949, %v1397
        %v1414 = vadd.f32 %v950, %v1398
        %v1415 = vadd.f32 %v951, %v1399
        %v1416 = vadd.f32 %v952, %v1400
        %v1417 = vadd.f32 %v953, %v1401
        %v1418 = vadd.f32 %v954, %v1402
        %v1419 = vadd.f32 %v955, %v1403
        %v1420 = vadd.f32 %v956, %v1404
        %v1421 = vadd.f32 %v957, %v1405
        %v1422 = vadd.f32 %v958, %v1406
        %v1423 = vadd.f32 %v959, %v1407
        %v1424 = vadd.f32 %v960, %v1408
        %v1425 = vadd.f32 %v961, %v1409
        %v1426 = vadd.f32 %v962, %v1410
        %1427 = vrot.lane.b32.xlu0 %v274, 20
        %v1428 = vpop.permute.xlu0 %1427
        %1429 = vrot.lane.b32.xlu0 %v275, 20
        %v1430 = vpop.permute.xlu0 %1429
        %1431 = vrot.lane.b32.xlu0 %v276, 20
        %v1432 = vpop.permute.xlu0 %1431
        %1433 = vrot.lane.b32.xlu0 %v277, 20
        %v1434 = vpop.permute.xlu0 %1433
        %1435 = vrot.lane.b32.xlu0 %v278, 20
        %v1436 = vpop.permute.xlu0 %1435
        %1437 = vrot.lane.b32.xlu0 %v279, 20
        %v1438 = vpop.permute.xlu0 %1437
        %1439 = vrot.lane.b32.xlu0 %v280, 20
        %v1440 = vpop.permute.xlu0 %1439
        %1441 = vrot.lane.b32.xlu0 %v281, 20
        %v1442 = vpop.permute.xlu0 %1441
        %1443 = vrot.lane.b32.xlu0 %v282, 20
        %v1444 = vpop.permute.xlu0 %1443
        %1445 = vrot.lane.b32.xlu0 %v283, 20
        %v1446 = vpop.permute.xlu0 %1445
        %1447 = vrot.lane.b32.xlu0 %v284, 20
        %v1448 = vpop.permute.xlu0 %1447
        %1449 = vrot.lane.b32.xlu0 %v285, 20
        %v1450 = vpop.permute.xlu0 %1449
        %1451 = vrot.lane.b32.xlu0 %v286, 20
        %v1452 = vpop.permute.xlu0 %1451
        %1453 = vrot.lane.b32.xlu0 %v287, 20
        %v1454 = vpop.permute.xlu0 %1453
        %1455 = vrot.lane.b32.xlu0 %v288, 20
        %v1456 = vpop.permute.xlu0 %1455
        %1457 = vrot.lane.b32.xlu0 %v289, 20
        %v1458 = vpop.permute.xlu0 %1457
        %v1475 = vmul.f32 %v306, %v1428
        %v1476 = vmul.f32 %v307, %v1430
        %v1477 = vmul.f32 %v308, %v1432
        %v1478 = vmul.f32 %v309, %v1434
        %v1479 = vmul.f32 %v310, %v1436
        %v1480 = vmul.f32 %v311, %v1438
        %v1481 = vmul.f32 %v312, %v1440
        %v1482 = vmul.f32 %v313, %v1442
        %v1483 = vmul.f32 %v314, %v1444
        %v1484 = vmul.f32 %v315, %v1446
        %v1485 = vmul.f32 %v316, %v1448
        %v1486 = vmul.f32 %v317, %v1450
        %v1487 = vmul.f32 %v318, %v1452
        %v1488 = vmul.f32 %v319, %v1454
        %v1489 = vmul.f32 %v320, %v1456
        %v1490 = vmul.f32 %v321, %v1458
        %1507 = vrot.lane.b32.xlu0 %v1475, 108
        %v1508 = vpop.permute.xlu0 %1507
        %1509 = vrot.lane.b32.xlu0 %v1476, 108
        %v1510 = vpop.permute.xlu0 %1509
        %1511 = vrot.lane.b32.xlu0 %v1477, 108
        %v1512 = vpop.permute.xlu0 %1511
        %1513 = vrot.lane.b32.xlu0 %v1478, 108
        %v1514 = vpop.permute.xlu0 %1513
        %1515 = vrot.lane.b32.xlu0 %v1479, 108
        %v1516 = vpop.permute.xlu0 %1515
        %1517 = vrot.lane.b32.xlu0 %v1480, 108
        %v1518 = vpop.permute.xlu0 %1517
        %1519 = vrot.lane.b32.xlu0 %v1481, 108
        %v1520 = vpop.permute.xlu0 %1519
        %1521 = vrot.lane.b32.xlu0 %v1482, 108
        %v1522 = vpop.permute.xlu0 %1521
        %1523 = vrot.lane.b32.xlu0 %v1483, 108
        %v1524 = vpop.permute.xlu0 %1523
        %1525 = vrot.lane.b32.xlu0 %v1484, 108
        %v1526 = vpop.permute.xlu0 %1525
        %1527 = vrot.lane.b32.xlu0 %v1485, 108
        %v1528 = vpop.permute.xlu0 %1527
        %1529 = vrot.lane.b32.xlu0 %v1486, 108
        %v1530 = vpop.permute.xlu0 %1529
        %1531 = vrot.lane.b32.xlu0 %v1487, 108
        %v1532 = vpop.permute.xlu0 %1531
        %1533 = vrot.lane.b32.xlu0 %v1488, 108
        %v1534 = vpop.permute.xlu0 %1533
        %1535 = vrot.lane.b32.xlu0 %v1489, 108
        %v1536 = vpop.permute.xlu0 %1535
        %1537 = vrot.lane.b32.xlu0 %v1490, 108
        %v1538 = vpop.permute.xlu0 %1537
        %v1555 = vsel %vm338, %v1508, 0.0
        %1556 = vadd.xlane.f32.xlu0 %v1555
        %v1557 = vpop.xlane.xlu0 %1556
        %v1558 = vsel %vm338, %v1510, 0.0
        %1559 = vadd.xlane.f32.xlu0 %v1558
        %v1560 = vpop.xlane.xlu0 %1559
        %v1561 = vsel %vm338, %v1512, 0.0
        %1562 = vadd.xlane.f32.xlu0 %v1561
        %v1563 = vpop.xlane.xlu0 %1562
        %v1564 = vsel %vm338, %v1514, 0.0
        %1565 = vadd.xlane.f32.xlu0 %v1564
        %v1566 = vpop.xlane.xlu0 %1565
        %v1567 = vsel %vm338, %v1516, 0.0
        %1568 = vadd.xlane.f32.xlu0 %v1567
        %v1569 = vpop.xlane.xlu0 %1568
        %v1570 = vsel %vm338, %v1518, 0.0
        %1571 = vadd.xlane.f32.xlu0 %v1570
        %v1572 = vpop.xlane.xlu0 %1571
        %v1573 = vsel %vm338, %v1520, 0.0
        %1574 = vadd.xlane.f32.xlu0 %v1573
        %v1575 = vpop.xlane.xlu0 %1574
        %v1576 = vsel %vm338, %v1522, 0.0
        %1577 = vadd.xlane.f32.xlu0 %v1576
        %v1578 = vpop.xlane.xlu0 %1577
        %v1579 = vsel %vm338, %v1524, 0.0
        %1580 = vadd.xlane.f32.xlu0 %v1579
        %v1581 = vpop.xlane.xlu0 %1580
        %v1582 = vsel %vm338, %v1526, 0.0
        %1583 = vadd.xlane.f32.xlu0 %v1582
        %v1584 = vpop.xlane.xlu0 %1583
        %v1585 = vsel %vm338, %v1528, 0.0
        %1586 = vadd.xlane.f32.xlu0 %v1585
        %v1587 = vpop.xlane.xlu0 %1586
        %v1588 = vsel %vm338, %v1530, 0.0
        %1589 = vadd.xlane.f32.xlu0 %v1588
        %v1590 = vpop.xlane.xlu0 %1589
        %v1591 = vsel %vm338, %v1532, 0.0
        %1592 = vadd.xlane.f32.xlu0 %v1591
        %v1593 = vpop.xlane.xlu0 %1592
        %v1594 = vsel %vm338, %v1534, 0.0
        %1595 = vadd.xlane.f32.xlu0 %v1594
        %v1596 = vpop.xlane.xlu0 %1595
        %v1597 = vsel %vm338, %v1536, 0.0
        %1598 = vadd.xlane.f32.xlu0 %v1597
        %v1599 = vpop.xlane.xlu0 %1598
        %v1600 = vsel %vm338, %v1538, 0.0
        %1601 = vadd.xlane.f32.xlu0 %v1600
        %v1602 = vpop.xlane.xlu0 %1601
        %v1603 = vsub.f32 0.0, %v1557
        %v1604 = vsub.f32 0.0, %v1560
        %v1605 = vsub.f32 0.0, %v1563
        %v1606 = vsub.f32 0.0, %v1566
        %v1607 = vsub.f32 0.0, %v1569
        %v1608 = vsub.f32 0.0, %v1572
        %v1609 = vsub.f32 0.0, %v1575
        %v1610 = vsub.f32 0.0, %v1578
        %v1611 = vsub.f32 0.0, %v1581
        %v1612 = vsub.f32 0.0, %v1584
        %v1613 = vsub.f32 0.0, %v1587
        %v1614 = vsub.f32 0.0, %v1590
        %v1615 = vsub.f32 0.0, %v1593
        %v1616 = vsub.f32 0.0, %v1596
        %v1617 = vsub.f32 0.0, %v1599
        %v1618 = vsub.f32 0.0, %v1602
        %v1619 = vmin.f32 %v1603, 0.0
        %v1620 = vmin.f32 %v1604, 0.0
        %v1621 = vmin.f32 %v1605, 0.0
        %v1622 = vmin.f32 %v1606, 0.0
        %v1623 = vmin.f32 %v1607, 0.0
        %v1624 = vmin.f32 %v1608, 0.0
        %v1625 = vmin.f32 %v1609, 0.0
        %v1626 = vmin.f32 %v1610, 0.0
        %v1627 = vmin.f32 %v1611, 0.0
        %v1628 = vmin.f32 %v1612, 0.0
        %v1629 = vmin.f32 %v1613, 0.0
        %v1630 = vmin.f32 %v1614, 0.0
        %v1631 = vmin.f32 %v1615, 0.0
        %v1632 = vmin.f32 %v1616, 0.0
        %v1633 = vmin.f32 %v1617, 0.0
        %v1634 = vmin.f32 %v1618, 0.0
        %v1635 = vand.u32 2147483647, %v1603
        %v1636 = vand.u32 2147483647, %v1604
        %v1637 = vand.u32 2147483647, %v1605
        %v1638 = vand.u32 2147483647, %v1606
        %v1639 = vand.u32 2147483647, %v1607
        %v1640 = vand.u32 2147483647, %v1608
        %v1641 = vand.u32 2147483647, %v1609
        %v1642 = vand.u32 2147483647, %v1610
        %v1643 = vand.u32 2147483647, %v1611
        %v1644 = vand.u32 2147483647, %v1612
        %v1645 = vand.u32 2147483647, %v1613
        %v1646 = vand.u32 2147483647, %v1614
        %v1647 = vand.u32 2147483647, %v1615
        %v1648 = vand.u32 2147483647, %v1616
        %v1649 = vand.u32 2147483647, %v1617
        %v1650 = vand.u32 2147483647, %v1618
        %v1651 = vsub.f32 0.0, %v1635
        %v1652 = vsub.f32 0.0, %v1636
        %v1653 = vsub.f32 0.0, %v1637
        %v1654 = vsub.f32 0.0, %v1638
        %v1655 = vsub.f32 0.0, %v1639
        %v1656 = vsub.f32 0.0, %v1640
        %v1657 = vsub.f32 0.0, %v1641
        %v1658 = vsub.f32 0.0, %v1642
        %v1659 = vsub.f32 0.0, %v1643
        %v1660 = vsub.f32 0.0, %v1644
        %v1661 = vsub.f32 0.0, %v1645
        %v1662 = vsub.f32 0.0, %v1646
        %v1663 = vsub.f32 0.0, %v1647
        %v1664 = vsub.f32 0.0, %v1648
        %v1665 = vsub.f32 0.0, %v1649
        %v1666 = vsub.f32 0.0, %v1650
        %v1667 = vmul.f32 %v1651, 1.442695
        %v1668 = vpow.pop %v1667
        %v1669 = vmul.f32 %v1652, 1.442695
        %v1670 = vpow.pop %v1669
        %v1671 = vmul.f32 %v1653, 1.442695
        %v1672 = vpow.pop %v1671
        %v1673 = vmul.f32 %v1654, 1.442695
        %v1674 = vpow.pop %v1673
        %v1675 = vmul.f32 %v1655, 1.442695
        %v1676 = vpow.pop %v1675
        %v1677 = vmul.f32 %v1656, 1.442695
        %v1678 = vpow.pop %v1677
        %v1679 = vmul.f32 %v1657, 1.442695
        %v1680 = vpow.pop %v1679
        %v1681 = vmul.f32 %v1658, 1.442695
        %v1682 = vpow.pop %v1681
        %v1683 = vmul.f32 %v1659, 1.442695
        %v1684 = vpow.pop %v1683
        %v1685 = vmul.f32 %v1660, 1.442695
        %v1686 = vpow.pop %v1685
        %v1687 = vmul.f32 %v1661, 1.442695
        %v1688 = vpow.pop %v1687
        %v1689 = vmul.f32 %v1662, 1.442695
        %v1690 = vpow.pop %v1689
        %v1691 = vmul.f32 %v1663, 1.442695
        %v1692 = vpow.pop %v1691
        %v1693 = vmul.f32 %v1664, 1.442695
        %v1694 = vpow.pop %v1693
        %v1695 = vmul.f32 %v1665, 1.442695
        %v1696 = vpow.pop %v1695
        %v1697 = vmul.f32 %v1666, 1.442695
        %v1698 = vpow.pop %v1697
        %v1699 = vadd.f32 %v1668, 1.0
        %v1700 = vlog2.pop %v1699
        %v1701 = vmul.f32 %v1700, 0.6931472
        %v1702 = vmul.f32 -0.5, %v1668
        %v1703 = vadd.f32 %v1702, 1.0
        %v1704 = vmul.f32 %v1703, %v1668
        %v1705 = vand.u32 2147483647, %v1668
        %vm1706 = vcmp.lt.f32.partialorder %v1705, 0.0004427343
        %v1707 = vsel %vm1706, %v1704, %v1701
        %v1708 = vadd.f32 %v1670, 1.0
        %v1709 = vlog2.pop %v1708
        %v1710 = vmul.f32 %v1709, 0.6931472
        %v1711 = vmul.f32 -0.5, %v1670
        %v1712 = vadd.f32 %v1711, 1.0
        %v1713 = vmul.f32 %v1712, %v1670
        %v1714 = vand.u32 2147483647, %v1670
        %vm1715 = vcmp.lt.f32.partialorder %v1714, 0.0004427343
        %v1716 = vsel %vm1715, %v1713, %v1710
        %v1717 = vadd.f32 %v1672, 1.0
        %v1718 = vlog2.pop %v1717
        %v1719 = vmul.f32 %v1718, 0.6931472
        %v1720 = vmul.f32 -0.5, %v1672
        %v1721 = vadd.f32 %v1720, 1.0
        %v1722 = vmul.f32 %v1721, %v1672
        %v1723 = vand.u32 2147483647, %v1672
        %vm1724 = vcmp.lt.f32.partialorder %v1723, 0.0004427343
        %v1725 = vsel %vm1724, %v1722, %v1719
        %v1726 = vadd.f32 %v1674, 1.0
        %v1727 = vlog2.pop %v1726
        %v1728 = vmul.f32 %v1727, 0.6931472
        %v1729 = vmul.f32 -0.5, %v1674
        %v1730 = vadd.f32 %v1729, 1.0
        %v1731 = vmul.f32 %v1730, %v1674
        %v1732 = vand.u32 2147483647, %v1674
        %vm1733 = vcmp.lt.f32.partialorder %v1732, 0.0004427343
        %v1734 = vsel %vm1733, %v1731, %v1728
        %v1735 = vadd.f32 %v1676, 1.0
        %v1736 = vlog2.pop %v1735
        %v1737 = vmul.f32 %v1736, 0.6931472
        %v1738 = vmul.f32 -0.5, %v1676
        %v1739 = vadd.f32 %v1738, 1.0
        %v1740 = vmul.f32 %v1739, %v1676
        %v1741 = vand.u32 2147483647, %v1676
        %vm1742 = vcmp.lt.f32.partialorder %v1741, 0.0004427343
        %v1743 = vsel %vm1742, %v1740, %v1737
        %v1744 = vadd.f32 %v1678, 1.0
        %v1745 = vlog2.pop %v1744
        %v1746 = vmul.f32 %v1745, 0.6931472
        %v1747 = vmul.f32 -0.5, %v1678
        %v1748 = vadd.f32 %v1747, 1.0
        %v1749 = vmul.f32 %v1748, %v1678
        %v1750 = vand.u32 2147483647, %v1678
        %vm1751 = vcmp.lt.f32.partialorder %v1750, 0.0004427343
        %v1752 = vsel %vm1751, %v1749, %v1746
        %v1753 = vadd.f32 %v1680, 1.0
        %v1754 = vlog2.pop %v1753
        %v1755 = vmul.f32 %v1754, 0.6931472
        %v1756 = vmul.f32 -0.5, %v1680
        %v1757 = vadd.f32 %v1756, 1.0
        %v1758 = vmul.f32 %v1757, %v1680
        %v1759 = vand.u32 2147483647, %v1680
        %vm1760 = vcmp.lt.f32.partialorder %v1759, 0.0004427343
        %v1761 = vsel %vm1760, %v1758, %v1755
        %v1762 = vadd.f32 %v1682, 1.0
        %v1763 = vlog2.pop %v1762
        %v1764 = vmul.f32 %v1763, 0.6931472
        %v1765 = vmul.f32 -0.5, %v1682
        %v1766 = vadd.f32 %v1765, 1.0
        %v1767 = vmul.f32 %v1766, %v1682
        %v1768 = vand.u32 2147483647, %v1682
        %vm1769 = vcmp.lt.f32.partialorder %v1768, 0.0004427343
        %v1770 = vsel %vm1769, %v1767, %v1764
        %v1771 = vadd.f32 %v1684, 1.0
        %v1772 = vlog2.pop %v1771
        %v1773 = vmul.f32 %v1772, 0.6931472
        %v1774 = vmul.f32 -0.5, %v1684
        %v1775 = vadd.f32 %v1774, 1.0
        %v1776 = vmul.f32 %v1775, %v1684
        %v1777 = vand.u32 2147483647, %v1684
        %vm1778 = vcmp.lt.f32.partialorder %v1777, 0.0004427343
        %v1779 = vsel %vm1778, %v1776, %v1773
        %v1780 = vadd.f32 %v1686, 1.0
        %v1781 = vlog2.pop %v1780
        %v1782 = vmul.f32 %v1781, 0.6931472
        %v1783 = vmul.f32 -0.5, %v1686
        %v1784 = vadd.f32 %v1783, 1.0
        %v1785 = vmul.f32 %v1784, %v1686
        %v1786 = vand.u32 2147483647, %v1686
        %vm1787 = vcmp.lt.f32.partialorder %v1786, 0.0004427343
        %v1788 = vsel %vm1787, %v1785, %v1782
        %v1789 = vadd.f32 %v1688, 1.0
        %v1790 = vlog2.pop %v1789
        %v1791 = vmul.f32 %v1790, 0.6931472
        %v1792 = vmul.f32 -0.5, %v1688
        %v1793 = vadd.f32 %v1792, 1.0
        %v1794 = vmul.f32 %v1793, %v1688
        %v1795 = vand.u32 2147483647, %v1688
        %vm1796 = vcmp.lt.f32.partialorder %v1795, 0.0004427343
        %v1797 = vsel %vm1796, %v1794, %v1791
        %v1798 = vadd.f32 %v1690, 1.0
        %v1799 = vlog2.pop %v1798
        %v1800 = vmul.f32 %v1799, 0.6931472
        %v1801 = vmul.f32 -0.5, %v1690
        %v1802 = vadd.f32 %v1801, 1.0
        %v1803 = vmul.f32 %v1802, %v1690
        %v1804 = vand.u32 2147483647, %v1690
        %vm1805 = vcmp.lt.f32.partialorder %v1804, 0.0004427343
        %v1806 = vsel %vm1805, %v1803, %v1800
        %v1807 = vadd.f32 %v1692, 1.0
        %v1808 = vlog2.pop %v1807
        %v1809 = vmul.f32 %v1808, 0.6931472
        %v1810 = vmul.f32 -0.5, %v1692
        %v1811 = vadd.f32 %v1810, 1.0
        %v1812 = vmul.f32 %v1811, %v1692
        %v1813 = vand.u32 2147483647, %v1692
        %vm1814 = vcmp.lt.f32.partialorder %v1813, 0.0004427343
        %v1815 = vsel %vm1814, %v1812, %v1809
        %v1816 = vadd.f32 %v1694, 1.0
        %v1817 = vlog2.pop %v1816
        %v1818 = vmul.f32 %v1817, 0.6931472
        %v1819 = vmul.f32 -0.5, %v1694
        %v1820 = vadd.f32 %v1819, 1.0
        %v1821 = vmul.f32 %v1820, %v1694
        %v1822 = vand.u32 2147483647, %v1694
        %vm1823 = vcmp.lt.f32.partialorder %v1822, 0.0004427343
        %v1824 = vsel %vm1823, %v1821, %v1818
        %v1825 = vadd.f32 %v1696, 1.0
        %v1826 = vlog2.pop %v1825
        %v1827 = vmul.f32 %v1826, 0.6931472
        %v1828 = vmul.f32 -0.5, %v1696
        %v1829 = vadd.f32 %v1828, 1.0
        %v1830 = vmul.f32 %v1829, %v1696
        %v1831 = vand.u32 2147483647, %v1696
        %vm1832 = vcmp.lt.f32.partialorder %v1831, 0.0004427343
        %v1833 = vsel %vm1832, %v1830, %v1827
        %v1834 = vadd.f32 %v1698, 1.0
        %v1835 = vlog2.pop %v1834
        %v1836 = vmul.f32 %v1835, 0.6931472
        %v1837 = vmul.f32 -0.5, %v1698
        %v1838 = vadd.f32 %v1837, 1.0
        %v1839 = vmul.f32 %v1838, %v1698
        %v1840 = vand.u32 2147483647, %v1698
        %vm1841 = vcmp.lt.f32.partialorder %v1840, 0.0004427343
        %v1842 = vsel %vm1841, %v1839, %v1836
        %v1843 = vsub.f32 %v1619, %v1707
        %v1844 = vsub.f32 %v1620, %v1716
        %v1845 = vsub.f32 %v1621, %v1725
        %v1846 = vsub.f32 %v1622, %v1734
        %v1847 = vsub.f32 %v1623, %v1743
        %v1848 = vsub.f32 %v1624, %v1752
        %v1849 = vsub.f32 %v1625, %v1761
        %v1850 = vsub.f32 %v1626, %v1770
        %v1851 = vsub.f32 %v1627, %v1779
        %v1852 = vsub.f32 %v1628, %v1788
        %v1853 = vsub.f32 %v1629, %v1797
        %v1854 = vsub.f32 %v1630, %v1806
        %v1855 = vsub.f32 %v1631, %v1815
        %v1856 = vsub.f32 %v1632, %v1824
        %v1857 = vsub.f32 %v1633, %v1833
        %v1858 = vsub.f32 %v1634, %v1842
        %v1859 = vadd.f32 %v1411, %v1843
        %v1860 = vadd.f32 %v1412, %v1844
        %v1861 = vadd.f32 %v1413, %v1845
        %v1862 = vadd.f32 %v1414, %v1846
        %v1863 = vadd.f32 %v1415, %v1847
        %v1864 = vadd.f32 %v1416, %v1848
        %v1865 = vadd.f32 %v1417, %v1849
        %v1866 = vadd.f32 %v1418, %v1850
        %v1867 = vadd.f32 %v1419, %v1851
        %v1868 = vadd.f32 %v1420, %v1852
        %v1869 = vadd.f32 %v1421, %v1853
        %v1870 = vadd.f32 %v1422, %v1854
        %v1871 = vadd.f32 %v1423, %v1855
        %v1872 = vadd.f32 %v1424, %v1856
        %v1873 = vadd.f32 %v1425, %v1857
        %v1874 = vadd.f32 %v1426, %v1858
        %1875 = vrot.lane.b32.xlu0 %v274, 30
        %v1876 = vpop.permute.xlu0 %1875
        %1877 = vrot.lane.b32.xlu0 %v275, 30
        %v1878 = vpop.permute.xlu0 %1877
        %1879 = vrot.lane.b32.xlu0 %v276, 30
        %v1880 = vpop.permute.xlu0 %1879
        %1881 = vrot.lane.b32.xlu0 %v277, 30
        %v1882 = vpop.permute.xlu0 %1881
        %1883 = vrot.lane.b32.xlu0 %v278, 30
        %v1884 = vpop.permute.xlu0 %1883
        %1885 = vrot.lane.b32.xlu0 %v279, 30
        %v1886 = vpop.permute.xlu0 %1885
        %1887 = vrot.lane.b32.xlu0 %v280, 30
        %v1888 = vpop.permute.xlu0 %1887
        %1889 = vrot.lane.b32.xlu0 %v281, 30
        %v1890 = vpop.permute.xlu0 %1889
        %1891 = vrot.lane.b32.xlu0 %v282, 30
        %v1892 = vpop.permute.xlu0 %1891
        %1893 = vrot.lane.b32.xlu0 %v283, 30
        %v1894 = vpop.permute.xlu0 %1893
        %1895 = vrot.lane.b32.xlu0 %v284, 30
        %v1896 = vpop.permute.xlu0 %1895
        %1897 = vrot.lane.b32.xlu0 %v285, 30
        %v1898 = vpop.permute.xlu0 %1897
        %1899 = vrot.lane.b32.xlu0 %v286, 30
        %v1900 = vpop.permute.xlu0 %1899
        %1901 = vrot.lane.b32.xlu0 %v287, 30
        %v1902 = vpop.permute.xlu0 %1901
        %1903 = vrot.lane.b32.xlu0 %v288, 30
        %v1904 = vpop.permute.xlu0 %1903
        %1905 = vrot.lane.b32.xlu0 %v289, 30
        %v1906 = vpop.permute.xlu0 %1905
        %v1923 = vmul.f32 %v306, %v1876
        %v1924 = vmul.f32 %v307, %v1878
        %v1925 = vmul.f32 %v308, %v1880
        %v1926 = vmul.f32 %v309, %v1882
        %v1927 = vmul.f32 %v310, %v1884
        %v1928 = vmul.f32 %v311, %v1886
        %v1929 = vmul.f32 %v312, %v1888
        %v1930 = vmul.f32 %v313, %v1890
        %v1931 = vmul.f32 %v314, %v1892
        %v1932 = vmul.f32 %v315, %v1894
        %v1933 = vmul.f32 %v316, %v1896
        %v1934 = vmul.f32 %v317, %v1898
        %v1935 = vmul.f32 %v318, %v1900
        %v1936 = vmul.f32 %v319, %v1902
        %v1937 = vmul.f32 %v320, %v1904
        %v1938 = vmul.f32 %v321, %v1906
        %1955 = vrot.lane.b32.xlu0 %v1923, 98
        %v1956 = vpop.permute.xlu0 %1955
        %1957 = vrot.lane.b32.xlu0 %v1924, 98
        %v1958 = vpop.permute.xlu0 %1957
        %1959 = vrot.lane.b32.xlu0 %v1925, 98
        %v1960 = vpop.permute.xlu0 %1959
        %1961 = vrot.lane.b32.xlu0 %v1926, 98
        %v1962 = vpop.permute.xlu0 %1961
        %1963 = vrot.lane.b32.xlu0 %v1927, 98
        %v1964 = vpop.permute.xlu0 %1963
        %1965 = vrot.lane.b32.xlu0 %v1928, 98
        %v1966 = vpop.permute.xlu0 %1965
        %1967 = vrot.lane.b32.xlu0 %v1929, 98
        %v1968 = vpop.permute.xlu0 %1967
        %1969 = vrot.lane.b32.xlu0 %v1930, 98
        %v1970 = vpop.permute.xlu0 %1969
        %1971 = vrot.lane.b32.xlu0 %v1931, 98
        %v1972 = vpop.permute.xlu0 %1971
        %1973 = vrot.lane.b32.xlu0 %v1932, 98
        %v1974 = vpop.permute.xlu0 %1973
        %1975 = vrot.lane.b32.xlu0 %v1933, 98
        %v1976 = vpop.permute.xlu0 %1975
        %1977 = vrot.lane.b32.xlu0 %v1934, 98
        %v1978 = vpop.permute.xlu0 %1977
        %1979 = vrot.lane.b32.xlu0 %v1935, 98
        %v1980 = vpop.permute.xlu0 %1979
        %1981 = vrot.lane.b32.xlu0 %v1936, 98
        %v1982 = vpop.permute.xlu0 %1981
        %1983 = vrot.lane.b32.xlu0 %v1937, 98
        %v1984 = vpop.permute.xlu0 %1983
        %1985 = vrot.lane.b32.xlu0 %v1938, 98
        %v1986 = vpop.permute.xlu0 %1985
        %v2003 = vsel %vm338, %v1956, 0.0
        %2004 = vadd.xlane.f32.xlu0 %v2003
        %v2005 = vpop.xlane.xlu0 %2004
        %v2006 = vsel %vm338, %v1958, 0.0
        %2007 = vadd.xlane.f32.xlu0 %v2006
        %v2008 = vpop.xlane.xlu0 %2007
        %v2009 = vsel %vm338, %v1960, 0.0
        %2010 = vadd.xlane.f32.xlu0 %v2009
        %v2011 = vpop.xlane.xlu0 %2010
        %v2012 = vsel %vm338, %v1962, 0.0
        %2013 = vadd.xlane.f32.xlu0 %v2012
        %v2014 = vpop.xlane.xlu0 %2013
        %v2015 = vsel %vm338, %v1964, 0.0
        %2016 = vadd.xlane.f32.xlu0 %v2015
        %v2017 = vpop.xlane.xlu0 %2016
        %v2018 = vsel %vm338, %v1966, 0.0
        %2019 = vadd.xlane.f32.xlu0 %v2018
        %v2020 = vpop.xlane.xlu0 %2019
        %v2021 = vsel %vm338, %v1968, 0.0
        %2022 = vadd.xlane.f32.xlu0 %v2021
        %v2023 = vpop.xlane.xlu0 %2022
        %v2024 = vsel %vm338, %v1970, 0.0
        %2025 = vadd.xlane.f32.xlu0 %v2024
        %v2026 = vpop.xlane.xlu0 %2025
        %v2027 = vsel %vm338, %v1972, 0.0
        %2028 = vadd.xlane.f32.xlu0 %v2027
        %v2029 = vpop.xlane.xlu0 %2028
        %v2030 = vsel %vm338, %v1974, 0.0
        %2031 = vadd.xlane.f32.xlu0 %v2030
        %v2032 = vpop.xlane.xlu0 %2031
        %v2033 = vsel %vm338, %v1976, 0.0
        %2034 = vadd.xlane.f32.xlu0 %v2033
        %v2035 = vpop.xlane.xlu0 %2034
        %v2036 = vsel %vm338, %v1978, 0.0
        %2037 = vadd.xlane.f32.xlu0 %v2036
        %v2038 = vpop.xlane.xlu0 %2037
        %v2039 = vsel %vm338, %v1980, 0.0
        %2040 = vadd.xlane.f32.xlu0 %v2039
        %v2041 = vpop.xlane.xlu0 %2040
        %v2042 = vsel %vm338, %v1982, 0.0
        %2043 = vadd.xlane.f32.xlu0 %v2042
        %v2044 = vpop.xlane.xlu0 %2043
        %v2045 = vsel %vm338, %v1984, 0.0
        %2046 = vadd.xlane.f32.xlu0 %v2045
        %v2047 = vpop.xlane.xlu0 %2046
        %v2048 = vsel %vm338, %v1986, 0.0
        %2049 = vadd.xlane.f32.xlu0 %v2048
        %v2050 = vpop.xlane.xlu0 %2049
        %v2051 = vsub.f32 0.0, %v2005
        %v2052 = vsub.f32 0.0, %v2008
        %v2053 = vsub.f32 0.0, %v2011
        %v2054 = vsub.f32 0.0, %v2014
        %v2055 = vsub.f32 0.0, %v2017
        %v2056 = vsub.f32 0.0, %v2020
        %v2057 = vsub.f32 0.0, %v2023
        %v2058 = vsub.f32 0.0, %v2026
        %v2059 = vsub.f32 0.0, %v2029
        %v2060 = vsub.f32 0.0, %v2032
        %v2061 = vsub.f32 0.0, %v2035
        %v2062 = vsub.f32 0.0, %v2038
        %v2063 = vsub.f32 0.0, %v2041
        %v2064 = vsub.f32 0.0, %v2044
        %v2065 = vsub.f32 0.0, %v2047
        %v2066 = vsub.f32 0.0, %v2050
        %v2067 = vmin.f32 %v2051, 0.0
        %v2068 = vmin.f32 %v2052, 0.0
        %v2069 = vmin.f32 %v2053, 0.0
        %v2070 = vmin.f32 %v2054, 0.0
        %v2071 = vmin.f32 %v2055, 0.0
        %v2072 = vmin.f32 %v2056, 0.0
        %v2073 = vmin.f32 %v2057, 0.0
        %v2074 = vmin.f32 %v2058, 0.0
        %v2075 = vmin.f32 %v2059, 0.0
        %v2076 = vmin.f32 %v2060, 0.0
        %v2077 = vmin.f32 %v2061, 0.0
        %v2078 = vmin.f32 %v2062, 0.0
        %v2079 = vmin.f32 %v2063, 0.0
        %v2080 = vmin.f32 %v2064, 0.0
        %v2081 = vmin.f32 %v2065, 0.0
        %v2082 = vmin.f32 %v2066, 0.0
        %v2083 = vand.u32 2147483647, %v2051
        %v2084 = vand.u32 2147483647, %v2052
        %v2085 = vand.u32 2147483647, %v2053
        %v2086 = vand.u32 2147483647, %v2054
        %v2087 = vand.u32 2147483647, %v2055
        %v2088 = vand.u32 2147483647, %v2056
        %v2089 = vand.u32 2147483647, %v2057
        %v2090 = vand.u32 2147483647, %v2058
        %v2091 = vand.u32 2147483647, %v2059
        %v2092 = vand.u32 2147483647, %v2060
        %v2093 = vand.u32 2147483647, %v2061
        %v2094 = vand.u32 2147483647, %v2062
        %v2095 = vand.u32 2147483647, %v2063
        %v2096 = vand.u32 2147483647, %v2064
        %v2097 = vand.u32 2147483647, %v2065
        %v2098 = vand.u32 2147483647, %v2066
        %v2099 = vsub.f32 0.0, %v2083
        %v2100 = vsub.f32 0.0, %v2084
        %v2101 = vsub.f32 0.0, %v2085
        %v2102 = vsub.f32 0.0, %v2086
        %v2103 = vsub.f32 0.0, %v2087
        %v2104 = vsub.f32 0.0, %v2088
        %v2105 = vsub.f32 0.0, %v2089
        %v2106 = vsub.f32 0.0, %v2090
        %v2107 = vsub.f32 0.0, %v2091
        %v2108 = vsub.f32 0.0, %v2092
        %v2109 = vsub.f32 0.0, %v2093
        %v2110 = vsub.f32 0.0, %v2094
        %v2111 = vsub.f32 0.0, %v2095
        %v2112 = vsub.f32 0.0, %v2096
        %v2113 = vsub.f32 0.0, %v2097
        %v2114 = vsub.f32 0.0, %v2098
        %v2115 = vmul.f32 %v2099, 1.442695
        %v2116 = vpow.pop %v2115
        %v2117 = vmul.f32 %v2100, 1.442695
        %v2118 = vpow.pop %v2117
        %v2119 = vmul.f32 %v2101, 1.442695
        %v2120 = vpow.pop %v2119
        %v2121 = vmul.f32 %v2102, 1.442695
        %v2122 = vpow.pop %v2121
        %v2123 = vmul.f32 %v2103, 1.442695
        %v2124 = vpow.pop %v2123
        %v2125 = vmul.f32 %v2104, 1.442695
        %v2126 = vpow.pop %v2125
        %v2127 = vmul.f32 %v2105, 1.442695
        %v2128 = vpow.pop %v2127
        %v2129 = vmul.f32 %v2106, 1.442695
        %v2130 = vpow.pop %v2129
        %v2131 = vmul.f32 %v2107, 1.442695
        %v2132 = vpow.pop %v2131
        %v2133 = vmul.f32 %v2108, 1.442695
        %v2134 = vpow.pop %v2133
        %v2135 = vmul.f32 %v2109, 1.442695
        %v2136 = vpow.pop %v2135
        %v2137 = vmul.f32 %v2110, 1.442695
        %v2138 = vpow.pop %v2137
        %v2139 = vmul.f32 %v2111, 1.442695
        %v2140 = vpow.pop %v2139
        %v2141 = vmul.f32 %v2112, 1.442695
        %v2142 = vpow.pop %v2141
        %v2143 = vmul.f32 %v2113, 1.442695
        %v2144 = vpow.pop %v2143
        %v2145 = vmul.f32 %v2114, 1.442695
        %v2146 = vpow.pop %v2145
        %v2147 = vadd.f32 %v2116, 1.0
        %v2148 = vlog2.pop %v2147
        %v2149 = vmul.f32 %v2148, 0.6931472
        %v2150 = vmul.f32 -0.5, %v2116
        %v2151 = vadd.f32 %v2150, 1.0
        %v2152 = vmul.f32 %v2151, %v2116
        %v2153 = vand.u32 2147483647, %v2116
        %vm2154 = vcmp.lt.f32.partialorder %v2153, 0.0004427343
        %v2155 = vsel %vm2154, %v2152, %v2149
        %v2156 = vadd.f32 %v2118, 1.0
        %v2157 = vlog2.pop %v2156
        %v2158 = vmul.f32 %v2157, 0.6931472
        %v2159 = vmul.f32 -0.5, %v2118
        %v2160 = vadd.f32 %v2159, 1.0
        %v2161 = vmul.f32 %v2160, %v2118
        %v2162 = vand.u32 2147483647, %v2118
        %vm2163 = vcmp.lt.f32.partialorder %v2162, 0.0004427343
        %v2164 = vsel %vm2163, %v2161, %v2158
        %v2165 = vadd.f32 %v2120, 1.0
        %v2166 = vlog2.pop %v2165
        %v2167 = vmul.f32 %v2166, 0.6931472
        %v2168 = vmul.f32 -0.5, %v2120
        %v2169 = vadd.f32 %v2168, 1.0
        %v2170 = vmul.f32 %v2169, %v2120
        %v2171 = vand.u32 2147483647, %v2120
        %vm2172 = vcmp.lt.f32.partialorder %v2171, 0.0004427343
        %v2173 = vsel %vm2172, %v2170, %v2167
        %v2174 = vadd.f32 %v2122, 1.0
        %v2175 = vlog2.pop %v2174
        %v2176 = vmul.f32 %v2175, 0.6931472
        %v2177 = vmul.f32 -0.5, %v2122
        %v2178 = vadd.f32 %v2177, 1.0
        %v2179 = vmul.f32 %v2178, %v2122
        %v2180 = vand.u32 2147483647, %v2122
        %vm2181 = vcmp.lt.f32.partialorder %v2180, 0.0004427343
        %v2182 = vsel %vm2181, %v2179, %v2176
        %v2183 = vadd.f32 %v2124, 1.0
        %v2184 = vlog2.pop %v2183
        %v2185 = vmul.f32 %v2184, 0.6931472
        %v2186 = vmul.f32 -0.5, %v2124
        %v2187 = vadd.f32 %v2186, 1.0
        %v2188 = vmul.f32 %v2187, %v2124
        %v2189 = vand.u32 2147483647, %v2124
        %vm2190 = vcmp.lt.f32.partialorder %v2189, 0.0004427343
        %v2191 = vsel %vm2190, %v2188, %v2185
        %v2192 = vadd.f32 %v2126, 1.0
        %v2193 = vlog2.pop %v2192
        %v2194 = vmul.f32 %v2193, 0.6931472
        %v2195 = vmul.f32 -0.5, %v2126
        %v2196 = vadd.f32 %v2195, 1.0
        %v2197 = vmul.f32 %v2196, %v2126
        %v2198 = vand.u32 2147483647, %v2126
        %vm2199 = vcmp.lt.f32.partialorder %v2198, 0.0004427343
        %v2200 = vsel %vm2199, %v2197, %v2194
        %v2201 = vadd.f32 %v2128, 1.0
        %v2202 = vlog2.pop %v2201
        %v2203 = vmul.f32 %v2202, 0.6931472
        %v2204 = vmul.f32 -0.5, %v2128
        %v2205 = vadd.f32 %v2204, 1.0
        %v2206 = vmul.f32 %v2205, %v2128
        %v2207 = vand.u32 2147483647, %v2128
        %vm2208 = vcmp.lt.f32.partialorder %v2207, 0.0004427343
        %v2209 = vsel %vm2208, %v2206, %v2203
        %v2210 = vadd.f32 %v2130, 1.0
        %v2211 = vlog2.pop %v2210
        %v2212 = vmul.f32 %v2211, 0.6931472
        %v2213 = vmul.f32 -0.5, %v2130
        %v2214 = vadd.f32 %v2213, 1.0
        %v2215 = vmul.f32 %v2214, %v2130
        %v2216 = vand.u32 2147483647, %v2130
        %vm2217 = vcmp.lt.f32.partialorder %v2216, 0.0004427343
        %v2218 = vsel %vm2217, %v2215, %v2212
        %v2219 = vadd.f32 %v2132, 1.0
        %v2220 = vlog2.pop %v2219
        %v2221 = vmul.f32 %v2220, 0.6931472
        %v2222 = vmul.f32 -0.5, %v2132
        %v2223 = vadd.f32 %v2222, 1.0
        %v2224 = vmul.f32 %v2223, %v2132
        %v2225 = vand.u32 2147483647, %v2132
        %vm2226 = vcmp.lt.f32.partialorder %v2225, 0.0004427343
        %v2227 = vsel %vm2226, %v2224, %v2221
        %v2228 = vadd.f32 %v2134, 1.0
        %v2229 = vlog2.pop %v2228
        %v2230 = vmul.f32 %v2229, 0.6931472
        %v2231 = vmul.f32 -0.5, %v2134
        %v2232 = vadd.f32 %v2231, 1.0
        %v2233 = vmul.f32 %v2232, %v2134
        %v2234 = vand.u32 2147483647, %v2134
        %vm2235 = vcmp.lt.f32.partialorder %v2234, 0.0004427343
        %v2236 = vsel %vm2235, %v2233, %v2230
        %v2237 = vadd.f32 %v2136, 1.0
        %v2238 = vlog2.pop %v2237
        %v2239 = vmul.f32 %v2238, 0.6931472
        %v2240 = vmul.f32 -0.5, %v2136
        %v2241 = vadd.f32 %v2240, 1.0
        %v2242 = vmul.f32 %v2241, %v2136
        %v2243 = vand.u32 2147483647, %v2136
        %vm2244 = vcmp.lt.f32.partialorder %v2243, 0.0004427343
        %v2245 = vsel %vm2244, %v2242, %v2239
        %v2246 = vadd.f32 %v2138, 1.0
        %v2247 = vlog2.pop %v2246
        %v2248 = vmul.f32 %v2247, 0.6931472
        %v2249 = vmul.f32 -0.5, %v2138
        %v2250 = vadd.f32 %v2249, 1.0
        %v2251 = vmul.f32 %v2250, %v2138
        %v2252 = vand.u32 2147483647, %v2138
        %vm2253 = vcmp.lt.f32.partialorder %v2252, 0.0004427343
        %v2254 = vsel %vm2253, %v2251, %v2248
        %v2255 = vadd.f32 %v2140, 1.0
        %v2256 = vlog2.pop %v2255
        %v2257 = vmul.f32 %v2256, 0.6931472
        %v2258 = vmul.f32 -0.5, %v2140
        %v2259 = vadd.f32 %v2258, 1.0
        %v2260 = vmul.f32 %v2259, %v2140
        %v2261 = vand.u32 2147483647, %v2140
        %vm2262 = vcmp.lt.f32.partialorder %v2261, 0.0004427343
        %v2263 = vsel %vm2262, %v2260, %v2257
        %v2264 = vadd.f32 %v2142, 1.0
        %v2265 = vlog2.pop %v2264
        %v2266 = vmul.f32 %v2265, 0.6931472
        %v2267 = vmul.f32 -0.5, %v2142
        %v2268 = vadd.f32 %v2267, 1.0
        %v2269 = vmul.f32 %v2268, %v2142
        %v2270 = vand.u32 2147483647, %v2142
        %vm2271 = vcmp.lt.f32.partialorder %v2270, 0.0004427343
        %v2272 = vsel %vm2271, %v2269, %v2266
        %v2273 = vadd.f32 %v2144, 1.0
        %v2274 = vlog2.pop %v2273
        %v2275 = vmul.f32 %v2274, 0.6931472
        %v2276 = vmul.f32 -0.5, %v2144
        %v2277 = vadd.f32 %v2276, 1.0
        %v2278 = vmul.f32 %v2277, %v2144
        %v2279 = vand.u32 2147483647, %v2144
        %vm2280 = vcmp.lt.f32.partialorder %v2279, 0.0004427343
        %v2281 = vsel %vm2280, %v2278, %v2275
        %v2282 = vadd.f32 %v2146, 1.0
        %v2283 = vlog2.pop %v2282
        %v2284 = vmul.f32 %v2283, 0.6931472
        %v2285 = vmul.f32 -0.5, %v2146
        %v2286 = vadd.f32 %v2285, 1.0
        %v2287 = vmul.f32 %v2286, %v2146
        %v2288 = vand.u32 2147483647, %v2146
        %vm2289 = vcmp.lt.f32.partialorder %v2288, 0.0004427343
        %v2290 = vsel %vm2289, %v2287, %v2284
        %v2291 = vsub.f32 %v2067, %v2155
        %v2292 = vsub.f32 %v2068, %v2164
        %v2293 = vsub.f32 %v2069, %v2173
        %v2294 = vsub.f32 %v2070, %v2182
        %v2295 = vsub.f32 %v2071, %v2191
        %v2296 = vsub.f32 %v2072, %v2200
        %v2297 = vsub.f32 %v2073, %v2209
        %v2298 = vsub.f32 %v2074, %v2218
        %v2299 = vsub.f32 %v2075, %v2227
        %v2300 = vsub.f32 %v2076, %v2236
        %v2301 = vsub.f32 %v2077, %v2245
        %v2302 = vsub.f32 %v2078, %v2254
        %v2303 = vsub.f32 %v2079, %v2263
        %v2304 = vsub.f32 %v2080, %v2272
        %v2305 = vsub.f32 %v2081, %v2281
        %v2306 = vsub.f32 %v2082, %v2290
        %v2307 = vadd.f32 %v1859, %v2291
        %v2308 = vadd.f32 %v1860, %v2292
        %v2309 = vadd.f32 %v1861, %v2293
        %v2310 = vadd.f32 %v1862, %v2294
        %v2311 = vadd.f32 %v1863, %v2295
        %v2312 = vadd.f32 %v1864, %v2296
        %v2313 = vadd.f32 %v1865, %v2297
        %v2314 = vadd.f32 %v1866, %v2298
        %v2315 = vadd.f32 %v1867, %v2299
        %v2316 = vadd.f32 %v1868, %v2300
        %v2317 = vadd.f32 %v1869, %v2301
        %v2318 = vadd.f32 %v1870, %v2302
        %v2319 = vadd.f32 %v1871, %v2303
        %v2320 = vadd.f32 %v1872, %v2304
        %v2321 = vadd.f32 %v1873, %v2305
        %v2322 = vadd.f32 %v1874, %v2306
        %2323 = vrot.lane.b32.xlu0 %v274, 40
        %v2324 = vpop.permute.xlu0 %2323
        %2325 = vrot.lane.b32.xlu0 %v275, 40
        %v2326 = vpop.permute.xlu0 %2325
        %2327 = vrot.lane.b32.xlu0 %v276, 40
        %v2328 = vpop.permute.xlu0 %2327
        %2329 = vrot.lane.b32.xlu0 %v277, 40
        %v2330 = vpop.permute.xlu0 %2329
        %2331 = vrot.lane.b32.xlu0 %v278, 40
        %v2332 = vpop.permute.xlu0 %2331
        %2333 = vrot.lane.b32.xlu0 %v279, 40
        %v2334 = vpop.permute.xlu0 %2333
        %2335 = vrot.lane.b32.xlu0 %v280, 40
        %v2336 = vpop.permute.xlu0 %2335
        %2337 = vrot.lane.b32.xlu0 %v281, 40
        %v2338 = vpop.permute.xlu0 %2337
        %2339 = vrot.lane.b32.xlu0 %v282, 40
        %v2340 = vpop.permute.xlu0 %2339
        %2341 = vrot.lane.b32.xlu0 %v283, 40
        %v2342 = vpop.permute.xlu0 %2341
        %2343 = vrot.lane.b32.xlu0 %v284, 40
        %v2344 = vpop.permute.xlu0 %2343
        %2345 = vrot.lane.b32.xlu0 %v285, 40
        %v2346 = vpop.permute.xlu0 %2345
        %2347 = vrot.lane.b32.xlu0 %v286, 40
        %v2348 = vpop.permute.xlu0 %2347
        %2349 = vrot.lane.b32.xlu0 %v287, 40
        %v2350 = vpop.permute.xlu0 %2349
        %2351 = vrot.lane.b32.xlu0 %v288, 40
        %v2352 = vpop.permute.xlu0 %2351
        %2353 = vrot.lane.b32.xlu0 %v289, 40
        %v2354 = vpop.permute.xlu0 %2353
        %v2371 = vmul.f32 %v306, %v2324
        %v2372 = vmul.f32 %v307, %v2326
        %v2373 = vmul.f32 %v308, %v2328
        %v2374 = vmul.f32 %v309, %v2330
        %v2375 = vmul.f32 %v310, %v2332
        %v2376 = vmul.f32 %v311, %v2334
        %v2377 = vmul.f32 %v312, %v2336
        %v2378 = vmul.f32 %v313, %v2338
        %v2379 = vmul.f32 %v314, %v2340
        %v2380 = vmul.f32 %v315, %v2342
        %v2381 = vmul.f32 %v316, %v2344
        %v2382 = vmul.f32 %v317, %v2346
        %v2383 = vmul.f32 %v318, %v2348
        %v2384 = vmul.f32 %v319, %v2350
        %v2385 = vmul.f32 %v320, %v2352
        %v2386 = vmul.f32 %v321, %v2354
        %2403 = vrot.lane.b32.xlu0 %v2371, 88
        %v2404 = vpop.permute.xlu0 %2403
        %2405 = vrot.lane.b32.xlu0 %v2372, 88
        %v2406 = vpop.permute.xlu0 %2405
        %2407 = vrot.lane.b32.xlu0 %v2373, 88
        %v2408 = vpop.permute.xlu0 %2407
        %2409 = vrot.lane.b32.xlu0 %v2374, 88
        %v2410 = vpop.permute.xlu0 %2409
        %2411 = vrot.lane.b32.xlu0 %v2375, 88
        %v2412 = vpop.permute.xlu0 %2411
        %2413 = vrot.lane.b32.xlu0 %v2376, 88
        %v2414 = vpop.permute.xlu0 %2413
        %2415 = vrot.lane.b32.xlu0 %v2377, 88
        %v2416 = vpop.permute.xlu0 %2415
        %2417 = vrot.lane.b32.xlu0 %v2378, 88
        %v2418 = vpop.permute.xlu0 %2417
        %2419 = vrot.lane.b32.xlu0 %v2379, 88
        %v2420 = vpop.permute.xlu0 %2419
        %2421 = vrot.lane.b32.xlu0 %v2380, 88
        %v2422 = vpop.permute.xlu0 %2421
        %2423 = vrot.lane.b32.xlu0 %v2381, 88
        %v2424 = vpop.permute.xlu0 %2423
        %2425 = vrot.lane.b32.xlu0 %v2382, 88
        %v2426 = vpop.permute.xlu0 %2425
        %2427 = vrot.lane.b32.xlu0 %v2383, 88
        %v2428 = vpop.permute.xlu0 %2427
        %2429 = vrot.lane.b32.xlu0 %v2384, 88
        %v2430 = vpop.permute.xlu0 %2429
        %2431 = vrot.lane.b32.xlu0 %v2385, 88
        %v2432 = vpop.permute.xlu0 %2431
        %2433 = vrot.lane.b32.xlu0 %v2386, 88
        %v2434 = vpop.permute.xlu0 %2433
        %v2451 = vsel %vm338, %v2404, 0.0
        %2452 = vadd.xlane.f32.xlu0 %v2451
        %v2453 = vpop.xlane.xlu0 %2452
        %v2454 = vsel %vm338, %v2406, 0.0
        %2455 = vadd.xlane.f32.xlu0 %v2454
        %v2456 = vpop.xlane.xlu0 %2455
        %v2457 = vsel %vm338, %v2408, 0.0
        %2458 = vadd.xlane.f32.xlu0 %v2457
        %v2459 = vpop.xlane.xlu0 %2458
        %v2460 = vsel %vm338, %v2410, 0.0
        %2461 = vadd.xlane.f32.xlu0 %v2460
        %v2462 = vpop.xlane.xlu0 %2461
        %v2463 = vsel %vm338, %v2412, 0.0
        %2464 = vadd.xlane.f32.xlu0 %v2463
        %v2465 = vpop.xlane.xlu0 %2464
        %v2466 = vsel %vm338, %v2414, 0.0
        %2467 = vadd.xlane.f32.xlu0 %v2466
        %v2468 = vpop.xlane.xlu0 %2467
        %v2469 = vsel %vm338, %v2416, 0.0
        %2470 = vadd.xlane.f32.xlu0 %v2469
        %v2471 = vpop.xlane.xlu0 %2470
        %v2472 = vsel %vm338, %v2418, 0.0
        %2473 = vadd.xlane.f32.xlu0 %v2472
        %v2474 = vpop.xlane.xlu0 %2473
        %v2475 = vsel %vm338, %v2420, 0.0
        %2476 = vadd.xlane.f32.xlu0 %v2475
        %v2477 = vpop.xlane.xlu0 %2476
        %v2478 = vsel %vm338, %v2422, 0.0
        %2479 = vadd.xlane.f32.xlu0 %v2478
        %v2480 = vpop.xlane.xlu0 %2479
        %v2481 = vsel %vm338, %v2424, 0.0
        %2482 = vadd.xlane.f32.xlu0 %v2481
        %v2483 = vpop.xlane.xlu0 %2482
        %v2484 = vsel %vm338, %v2426, 0.0
        %2485 = vadd.xlane.f32.xlu0 %v2484
        %v2486 = vpop.xlane.xlu0 %2485
        %v2487 = vsel %vm338, %v2428, 0.0
        %2488 = vadd.xlane.f32.xlu0 %v2487
        %v2489 = vpop.xlane.xlu0 %2488
        %v2490 = vsel %vm338, %v2430, 0.0
        %2491 = vadd.xlane.f32.xlu0 %v2490
        %v2492 = vpop.xlane.xlu0 %2491
        %v2493 = vsel %vm338, %v2432, 0.0
        %2494 = vadd.xlane.f32.xlu0 %v2493
        %v2495 = vpop.xlane.xlu0 %2494
        %v2496 = vsel %vm338, %v2434, 0.0
        %2497 = vadd.xlane.f32.xlu0 %v2496
        %v2498 = vpop.xlane.xlu0 %2497
        %v2499 = vsub.f32 0.0, %v2453
        %v2500 = vsub.f32 0.0, %v2456
        %v2501 = vsub.f32 0.0, %v2459
        %v2502 = vsub.f32 0.0, %v2462
        %v2503 = vsub.f32 0.0, %v2465
        %v2504 = vsub.f32 0.0, %v2468
        %v2505 = vsub.f32 0.0, %v2471
        %v2506 = vsub.f32 0.0, %v2474
        %v2507 = vsub.f32 0.0, %v2477
        %v2508 = vsub.f32 0.0, %v2480
        %v2509 = vsub.f32 0.0, %v2483
        %v2510 = vsub.f32 0.0, %v2486
        %v2511 = vsub.f32 0.0, %v2489
        %v2512 = vsub.f32 0.0, %v2492
        %v2513 = vsub.f32 0.0, %v2495
        %v2514 = vsub.f32 0.0, %v2498
        %v2515 = vmin.f32 %v2499, 0.0
        %v2516 = vmin.f32 %v2500, 0.0
        %v2517 = vmin.f32 %v2501, 0.0
        %v2518 = vmin.f32 %v2502, 0.0
        %v2519 = vmin.f32 %v2503, 0.0
        %v2520 = vmin.f32 %v2504, 0.0
        %v2521 = vmin.f32 %v2505, 0.0
        %v2522 = vmin.f32 %v2506, 0.0
        %v2523 = vmin.f32 %v2507, 0.0
        %v2524 = vmin.f32 %v2508, 0.0
        %v2525 = vmin.f32 %v2509, 0.0
        %v2526 = vmin.f32 %v2510, 0.0
        %v2527 = vmin.f32 %v2511, 0.0
        %v2528 = vmin.f32 %v2512, 0.0
        %v2529 = vmin.f32 %v2513, 0.0
        %v2530 = vmin.f32 %v2514, 0.0
        %v2531 = vand.u32 2147483647, %v2499
        %v2532 = vand.u32 2147483647, %v2500
        %v2533 = vand.u32 2147483647, %v2501
        %v2534 = vand.u32 2147483647, %v2502
        %v2535 = vand.u32 2147483647, %v2503
        %v2536 = vand.u32 2147483647, %v2504
        %v2537 = vand.u32 2147483647, %v2505
        %v2538 = vand.u32 2147483647, %v2506
        %v2539 = vand.u32 2147483647, %v2507
        %v2540 = vand.u32 2147483647, %v2508
        %v2541 = vand.u32 2147483647, %v2509
        %v2542 = vand.u32 2147483647, %v2510
        %v2543 = vand.u32 2147483647, %v2511
        %v2544 = vand.u32 2147483647, %v2512
        %v2545 = vand.u32 2147483647, %v2513
        %v2546 = vand.u32 2147483647, %v2514
        %v2547 = vsub.f32 0.0, %v2531
        %v2548 = vsub.f32 0.0, %v2532
        %v2549 = vsub.f32 0.0, %v2533
        %v2550 = vsub.f32 0.0, %v2534
        %v2551 = vsub.f32 0.0, %v2535
        %v2552 = vsub.f32 0.0, %v2536
        %v2553 = vsub.f32 0.0, %v2537
        %v2554 = vsub.f32 0.0, %v2538
        %v2555 = vsub.f32 0.0, %v2539
        %v2556 = vsub.f32 0.0, %v2540
        %v2557 = vsub.f32 0.0, %v2541
        %v2558 = vsub.f32 0.0, %v2542
        %v2559 = vsub.f32 0.0, %v2543
        %v2560 = vsub.f32 0.0, %v2544
        %v2561 = vsub.f32 0.0, %v2545
        %v2562 = vsub.f32 0.0, %v2546
        %v2563 = vmul.f32 %v2547, 1.442695
        %v2564 = vpow.pop %v2563
        %v2565 = vmul.f32 %v2548, 1.442695
        %v2566 = vpow.pop %v2565
        %v2567 = vmul.f32 %v2549, 1.442695
        %v2568 = vpow.pop %v2567
        %v2569 = vmul.f32 %v2550, 1.442695
        %v2570 = vpow.pop %v2569
        %v2571 = vmul.f32 %v2551, 1.442695
        %v2572 = vpow.pop %v2571
        %v2573 = vmul.f32 %v2552, 1.442695
        %v2574 = vpow.pop %v2573
        %v2575 = vmul.f32 %v2553, 1.442695
        %v2576 = vpow.pop %v2575
        %v2577 = vmul.f32 %v2554, 1.442695
        %v2578 = vpow.pop %v2577
        %v2579 = vmul.f32 %v2555, 1.442695
        %v2580 = vpow.pop %v2579
        %v2581 = vmul.f32 %v2556, 1.442695
        %v2582 = vpow.pop %v2581
        %v2583 = vmul.f32 %v2557, 1.442695
        %v2584 = vpow.pop %v2583
        %v2585 = vmul.f32 %v2558, 1.442695
        %v2586 = vpow.pop %v2585
        %v2587 = vmul.f32 %v2559, 1.442695
        %v2588 = vpow.pop %v2587
        %v2589 = vmul.f32 %v2560, 1.442695
        %v2590 = vpow.pop %v2589
        %v2591 = vmul.f32 %v2561, 1.442695
        %v2592 = vpow.pop %v2591
        %v2593 = vmul.f32 %v2562, 1.442695
        %v2594 = vpow.pop %v2593
        %v2595 = vadd.f32 %v2564, 1.0
        %v2596 = vlog2.pop %v2595
        %v2597 = vmul.f32 %v2596, 0.6931472
        %v2598 = vmul.f32 -0.5, %v2564
        %v2599 = vadd.f32 %v2598, 1.0
        %v2600 = vmul.f32 %v2599, %v2564
        %v2601 = vand.u32 2147483647, %v2564
        %vm2602 = vcmp.lt.f32.partialorder %v2601, 0.0004427343
        %v2603 = vsel %vm2602, %v2600, %v2597
        %v2604 = vadd.f32 %v2566, 1.0
        %v2605 = vlog2.pop %v2604
        %v2606 = vmul.f32 %v2605, 0.6931472
        %v2607 = vmul.f32 -0.5, %v2566
        %v2608 = vadd.f32 %v2607, 1.0
        %v2609 = vmul.f32 %v2608, %v2566
        %v2610 = vand.u32 2147483647, %v2566
        %vm2611 = vcmp.lt.f32.partialorder %v2610, 0.0004427343
        %v2612 = vsel %vm2611, %v2609, %v2606
        %v2613 = vadd.f32 %v2568, 1.0
        %v2614 = vlog2.pop %v2613
        %v2615 = vmul.f32 %v2614, 0.6931472
        %v2616 = vmul.f32 -0.5, %v2568
        %v2617 = vadd.f32 %v2616, 1.0
        %v2618 = vmul.f32 %v2617, %v2568
        %v2619 = vand.u32 2147483647, %v2568
        %vm2620 = vcmp.lt.f32.partialorder %v2619, 0.0004427343
        %v2621 = vsel %vm2620, %v2618, %v2615
        %v2622 = vadd.f32 %v2570, 1.0
        %v2623 = vlog2.pop %v2622
        %v2624 = vmul.f32 %v2623, 0.6931472
        %v2625 = vmul.f32 -0.5, %v2570
        %v2626 = vadd.f32 %v2625, 1.0
        %v2627 = vmul.f32 %v2626, %v2570
        %v2628 = vand.u32 2147483647, %v2570
        %vm2629 = vcmp.lt.f32.partialorder %v2628, 0.0004427343
        %v2630 = vsel %vm2629, %v2627, %v2624
        %v2631 = vadd.f32 %v2572, 1.0
        %v2632 = vlog2.pop %v2631
        %v2633 = vmul.f32 %v2632, 0.6931472
        %v2634 = vmul.f32 -0.5, %v2572
        %v2635 = vadd.f32 %v2634, 1.0
        %v2636 = vmul.f32 %v2635, %v2572
        %v2637 = vand.u32 2147483647, %v2572
        %vm2638 = vcmp.lt.f32.partialorder %v2637, 0.0004427343
        %v2639 = vsel %vm2638, %v2636, %v2633
        %v2640 = vadd.f32 %v2574, 1.0
        %v2641 = vlog2.pop %v2640
        %v2642 = vmul.f32 %v2641, 0.6931472
        %v2643 = vmul.f32 -0.5, %v2574
        %v2644 = vadd.f32 %v2643, 1.0
        %v2645 = vmul.f32 %v2644, %v2574
        %v2646 = vand.u32 2147483647, %v2574
        %vm2647 = vcmp.lt.f32.partialorder %v2646, 0.0004427343
        %v2648 = vsel %vm2647, %v2645, %v2642
        %v2649 = vadd.f32 %v2576, 1.0
        %v2650 = vlog2.pop %v2649
        %v2651 = vmul.f32 %v2650, 0.6931472
        %v2652 = vmul.f32 -0.5, %v2576
        %v2653 = vadd.f32 %v2652, 1.0
        %v2654 = vmul.f32 %v2653, %v2576
        %v2655 = vand.u32 2147483647, %v2576
        %vm2656 = vcmp.lt.f32.partialorder %v2655, 0.0004427343
        %v2657 = vsel %vm2656, %v2654, %v2651
        %v2658 = vadd.f32 %v2578, 1.0
        %v2659 = vlog2.pop %v2658
        %v2660 = vmul.f32 %v2659, 0.6931472
        %v2661 = vmul.f32 -0.5, %v2578
        %v2662 = vadd.f32 %v2661, 1.0
        %v2663 = vmul.f32 %v2662, %v2578
        %v2664 = vand.u32 2147483647, %v2578
        %vm2665 = vcmp.lt.f32.partialorder %v2664, 0.0004427343
        %v2666 = vsel %vm2665, %v2663, %v2660
        %v2667 = vadd.f32 %v2580, 1.0
        %v2668 = vlog2.pop %v2667
        %v2669 = vmul.f32 %v2668, 0.6931472
        %v2670 = vmul.f32 -0.5, %v2580
        %v2671 = vadd.f32 %v2670, 1.0
        %v2672 = vmul.f32 %v2671, %v2580
        %v2673 = vand.u32 2147483647, %v2580
        %vm2674 = vcmp.lt.f32.partialorder %v2673, 0.0004427343
        %v2675 = vsel %vm2674, %v2672, %v2669
        %v2676 = vadd.f32 %v2582, 1.0
        %v2677 = vlog2.pop %v2676
        %v2678 = vmul.f32 %v2677, 0.6931472
        %v2679 = vmul.f32 -0.5, %v2582
        %v2680 = vadd.f32 %v2679, 1.0
        %v2681 = vmul.f32 %v2680, %v2582
        %v2682 = vand.u32 2147483647, %v2582
        %vm2683 = vcmp.lt.f32.partialorder %v2682, 0.0004427343
        %v2684 = vsel %vm2683, %v2681, %v2678
        %v2685 = vadd.f32 %v2584, 1.0
        %v2686 = vlog2.pop %v2685
        %v2687 = vmul.f32 %v2686, 0.6931472
        %v2688 = vmul.f32 -0.5, %v2584
        %v2689 = vadd.f32 %v2688, 1.0
        %v2690 = vmul.f32 %v2689, %v2584
        %v2691 = vand.u32 2147483647, %v2584
        %vm2692 = vcmp.lt.f32.partialorder %v2691, 0.0004427343
        %v2693 = vsel %vm2692, %v2690, %v2687
        %v2694 = vadd.f32 %v2586, 1.0
        %v2695 = vlog2.pop %v2694
        %v2696 = vmul.f32 %v2695, 0.6931472
        %v2697 = vmul.f32 -0.5, %v2586
        %v2698 = vadd.f32 %v2697, 1.0
        %v2699 = vmul.f32 %v2698, %v2586
        %v2700 = vand.u32 2147483647, %v2586
        %vm2701 = vcmp.lt.f32.partialorder %v2700, 0.0004427343
        %v2702 = vsel %vm2701, %v2699, %v2696
        %v2703 = vadd.f32 %v2588, 1.0
        %v2704 = vlog2.pop %v2703
        %v2705 = vmul.f32 %v2704, 0.6931472
        %v2706 = vmul.f32 -0.5, %v2588
        %v2707 = vadd.f32 %v2706, 1.0
        %v2708 = vmul.f32 %v2707, %v2588
        %v2709 = vand.u32 2147483647, %v2588
        %vm2710 = vcmp.lt.f32.partialorder %v2709, 0.0004427343
        %v2711 = vsel %vm2710, %v2708, %v2705
        %v2712 = vadd.f32 %v2590, 1.0
        %v2713 = vlog2.pop %v2712
        %v2714 = vmul.f32 %v2713, 0.6931472
        %v2715 = vmul.f32 -0.5, %v2590
        %v2716 = vadd.f32 %v2715, 1.0
        %v2717 = vmul.f32 %v2716, %v2590
        %v2718 = vand.u32 2147483647, %v2590
        %vm2719 = vcmp.lt.f32.partialorder %v2718, 0.0004427343
        %v2720 = vsel %vm2719, %v2717, %v2714
        %v2721 = vadd.f32 %v2592, 1.0
        %v2722 = vlog2.pop %v2721
        %v2723 = vmul.f32 %v2722, 0.6931472
        %v2724 = vmul.f32 -0.5, %v2592
        %v2725 = vadd.f32 %v2724, 1.0
        %v2726 = vmul.f32 %v2725, %v2592
        %v2727 = vand.u32 2147483647, %v2592
        %vm2728 = vcmp.lt.f32.partialorder %v2727, 0.0004427343
        %v2729 = vsel %vm2728, %v2726, %v2723
        %v2730 = vadd.f32 %v2594, 1.0
        %v2731 = vlog2.pop %v2730
        %v2732 = vmul.f32 %v2731, 0.6931472
        %v2733 = vmul.f32 -0.5, %v2594
        %v2734 = vadd.f32 %v2733, 1.0
        %v2735 = vmul.f32 %v2734, %v2594
        %v2736 = vand.u32 2147483647, %v2594
        %vm2737 = vcmp.lt.f32.partialorder %v2736, 0.0004427343
        %v2738 = vsel %vm2737, %v2735, %v2732
        %v2739 = vsub.f32 %v2515, %v2603
        %v2740 = vsub.f32 %v2516, %v2612
        %v2741 = vsub.f32 %v2517, %v2621
        %v2742 = vsub.f32 %v2518, %v2630
        %v2743 = vsub.f32 %v2519, %v2639
        %v2744 = vsub.f32 %v2520, %v2648
        %v2745 = vsub.f32 %v2521, %v2657
        %v2746 = vsub.f32 %v2522, %v2666
        %v2747 = vsub.f32 %v2523, %v2675
        %v2748 = vsub.f32 %v2524, %v2684
        %v2749 = vsub.f32 %v2525, %v2693
        %v2750 = vsub.f32 %v2526, %v2702
        %v2751 = vsub.f32 %v2527, %v2711
        %v2752 = vsub.f32 %v2528, %v2720
        %v2753 = vsub.f32 %v2529, %v2729
        %v2754 = vsub.f32 %v2530, %v2738
        %v2755 = vadd.f32 %v2307, %v2739
        %v2756 = vadd.f32 %v2308, %v2740
        %v2757 = vadd.f32 %v2309, %v2741
        %v2758 = vadd.f32 %v2310, %v2742
        %v2759 = vadd.f32 %v2311, %v2743
        %v2760 = vadd.f32 %v2312, %v2744
        %v2761 = vadd.f32 %v2313, %v2745
        %v2762 = vadd.f32 %v2314, %v2746
        %v2763 = vadd.f32 %v2315, %v2747
        %v2764 = vadd.f32 %v2316, %v2748
        %v2765 = vadd.f32 %v2317, %v2749
        %v2766 = vadd.f32 %v2318, %v2750
        %v2767 = vadd.f32 %v2319, %v2751
        %v2768 = vadd.f32 %v2320, %v2752
        %v2769 = vadd.f32 %v2321, %v2753
        %v2770 = vadd.f32 %v2322, %v2754
        %s2771 = smul.u32 %s17, 128
        %v2772 = vlaneseq
        %v2773 = vshrl.u32 %v2772, 7
        %v2774 = vadd.s32 %v2773, 8
        %v2775 = vadd.s32 %v2773, 16
        %v2776 = vadd.s32 %v2773, 24
        %v2777 = vadd.s32 %v2773, 32
        %v2778 = vadd.s32 %v2773, 40
        %v2779 = vadd.s32 %v2773, 48
        %v2780 = vadd.s32 %v2773, 56
        %v2781 = vadd.s32 %v2773, 64
        %v2782 = vadd.s32 %v2773, 72
        %v2783 = vadd.s32 %v2773, 80
        %v2784 = vadd.s32 %v2773, 88
        %v2785 = vadd.s32 %v2773, 96
        %v2786 = vadd.s32 %v2773, 104
        %v2787 = vadd.s32 %v2773, 112
        %v2788 = vadd.s32 %v2773, 120
        %v2789 = vstv %s2771
        %v2790 = vadd.s32 %v2789, %v2773
        %v2791 = vadd.s32 %v2789, %v2774
        %v2792 = vadd.s32 %v2789, %v2775
        %v2793 = vadd.s32 %v2789, %v2776
        %v2794 = vadd.s32 %v2789, %v2777
        %v2795 = vadd.s32 %v2789, %v2778
        %v2796 = vadd.s32 %v2789, %v2779
        %v2797 = vadd.s32 %v2789, %v2780
        %v2798 = vadd.s32 %v2789, %v2781
        %v2799 = vadd.s32 %v2789, %v2782
        %v2800 = vadd.s32 %v2789, %v2783
        %v2801 = vadd.s32 %v2789, %v2784
        %v2802 = vadd.s32 %v2789, %v2785
        %v2803 = vadd.s32 %v2789, %v2786
        %v2804 = vadd.s32 %v2789, %v2787
        %v2805 = vadd.s32 %v2789, %v2788
        %vm2806 = vcmp.lt.s32.totalorder %v2790, 300
        %vm2807 = vcmp.lt.s32.totalorder %v2791, 300
        %vm2808 = vcmp.lt.s32.totalorder %v2792, 300
        %vm2809 = vcmp.lt.s32.totalorder %v2793, 300
        %vm2810 = vcmp.lt.s32.totalorder %v2794, 300
        %vm2811 = vcmp.lt.s32.totalorder %v2795, 300
        %vm2812 = vcmp.lt.s32.totalorder %v2796, 300
        %vm2813 = vcmp.lt.s32.totalorder %v2797, 300
        %vm2814 = vcmp.lt.s32.totalorder %v2798, 300
        %vm2815 = vcmp.lt.s32.totalorder %v2799, 300
        %vm2816 = vcmp.lt.s32.totalorder %v2800, 300
        %vm2817 = vcmp.lt.s32.totalorder %v2801, 300
        %vm2818 = vcmp.lt.s32.totalorder %v2802, 300
        %vm2819 = vcmp.lt.s32.totalorder %v2803, 300
        %vm2820 = vcmp.lt.s32.totalorder %v2804, 300
        %vm2821 = vcmp.lt.s32.totalorder %v2805, 300
        %v2822 = vsel %vm2806, %v2755, 0.0
        %v2823 = vsel %vm2807, %v2756, 0.0
        %v2824 = vsel %vm2808, %v2757, 0.0
        %v2825 = vsel %vm2809, %v2758, 0.0
        %v2826 = vsel %vm2810, %v2759, 0.0
        %v2827 = vsel %vm2811, %v2760, 0.0
        %v2828 = vsel %vm2812, %v2761, 0.0
        %v2829 = vsel %vm2813, %v2762, 0.0
        %v2830 = vsel %vm2814, %v2763, 0.0
        %v2831 = vsel %vm2815, %v2764, 0.0
        %v2832 = vsel %vm2816, %v2765, 0.0
        %v2833 = vsel %vm2817, %v2766, 0.0
        %v2834 = vsel %vm2818, %v2767, 0.0
        %v2835 = vsel %vm2819, %v2768, 0.0
        %v2836 = vsel %vm2820, %v2769, 0.0
        %v2837 = vsel %vm2821, %v2770, 0.0
        %v2838 = vadd.f32 %v2822, %v2823
        %v2839 = vadd.f32 %v2838, %v2824
        %v2840 = vadd.f32 %v2839, %v2825
        %v2841 = vadd.f32 %v2840, %v2826
        %v2842 = vadd.f32 %v2841, %v2827
        %v2843 = vadd.f32 %v2842, %v2828
        %v2844 = vadd.f32 %v2843, %v2829
        %v2845 = vadd.f32 %v2844, %v2830
        %v2846 = vadd.f32 %v2845, %v2831
        %v2847 = vadd.f32 %v2846, %v2832
        %v2848 = vadd.f32 %v2847, %v2833
        %v2849 = vadd.f32 %v2848, %v2834
        %v2850 = vadd.f32 %v2849, %v2835
        %v2851 = vadd.f32 %v2850, %v2836
        %v2852 = vadd.f32 %v2851, %v2837
        %v2853 = vrot.slane %v2852, 4
        %v2854 = vadd.f32 %v2852, %v2853
        %v2855 = vrot.slane %v2854, 2
        %v2856 = vadd.f32 %v2854, %v2855
        %v2857 = vrot.slane %v2856, 1
        %v2858 = vadd.f32 %v2856, %v2857
        %2859 = vst [vmem:[%s231] sm:$0x1] %v2858
        %s2860 = sand.u32 %s103, 1
        %s2861 = scalar_lea.sflag [#allocation3], %s2860
        %s2862 = sand.u32 %s103, 1
        %s2863 = scalar_lea.vmem [#allocation2], %s2862
        // Predicated region
        $region33: #{tpu_custom_call.1} parent=31 // pred_check
          %p2864 = pneg %p113
        $region34: #{tpu_custom_call.1} parent=31 // pred_check_branch
          %2866 = sbr.rel (%p2864) target = $region36
        $region35: #{tpu_custom_call.1} parent=31 // pred_region
          %s2868 = ssub.s32 16, 16
          %2869 = vsyncadd %s2861, %s2868
          %s2870 = smul.addr %s17, 16
          %s2871 = scalar_lea.hbm %s3, %s2870
          %s2873 = sshll.u32 %s2863, 4
          %s2874 = int_to_ptr.vmem [resolvable:$true] %s2873
          %2876 = dma.vmem_to_hbm [thread:$0]  %s2874, 16, %s2871, %s2861
        $region36: #{tpu_custom_call.1} parent=31 // pred_fallthru
          _
      $region32: #{tpu_custom_call.1} parent=5 // pred_fallthru
        _
      %p2877 = scmp.le.s32.totalorder 2, %s12
      // Predicated region
      $region37: #{tpu_custom_call.1} parent=5 // pred_check
        %p2878 = pneg %p2877
      $region38: #{tpu_custom_call.1} parent=5 // pred_check_branch
        %2880 = sbr.rel (%p2878) target = $region40
      $region39: #{tpu_custom_call.1} parent=5 // pred_region
        %s2881 = ssub.s32 %s12, 2
        // Predicated region
        $region41: #{tpu_custom_call.1} parent=39 // pred_check
          %p2882 = pneg %p119
        $region42: #{tpu_custom_call.1} parent=39 // pred_check_branch
          %2884 = sbr.rel (%p2882) target = $region44
        $region43: #{tpu_custom_call.1} parent=39 // pred_region
          %s2885 = sand.u32 %s104, 1
          %s2886 = scalar_lea.sflag [#allocation3], %s2885
          %s2887 = sand.u32 %s104, 1
          %s2888 = scalar_lea.vmem [#allocation2], %s2887
          %2889 = dma.done %s2886, 16
        $region44: #{tpu_custom_call.1} parent=39 // pred_fallthru
          _
      $region40: #{tpu_custom_call.1} parent=5 // pred_fallthru
        _
    $region6: #{tpu_custom_call.1} parent=1 // loop_footer
      %s16 = sadd.s32 1, %s12
    $region7: #{tpu_custom_call.1} parent=1 // loop_footer_branch
      %11 = sbr.rel target = $region3
    $region8: #{tpu_custom_call.1} parent=1 // loop_exit
      _
    %2890 = vsyncpa [#allocation3], 1
    %s2891 = scalar_lea.sflag [#allocation3], 1
    %2892 = vsyncpa %s2891, 1

</llo_original>
